<compile_context>
chip_gen: v7x
topology: tpu7x:2x2x1
jax: 0.10.0
libtpu: 0.0.40
codegen_flags: <defaults>
</compile_context>

<pallas_src>
import functools

import jax
import jax.numpy as jnp
from jax import lax
from jax.experimental import pallas as pl
from jax.experimental.pallas import tpu as pltpu

VOCAB_SIZE = 100
VOCAB_PAD = 128    # vocab padded to a full 128-lane tile for the one-hot gather
EMBED_DIM = 20
RNN_HIDDEN = 64
FC_HIDDEN = 64
FC_PAD = 128       # fc width padded to a full 128-lane tile
NUM_GATES = 4      # packed gate order used by this kernel: i, f, o, g


def lstm_fc_kernel(ids_ref, len_ref, gtab_ref, gbias_ref, whh_ref, wfc1_ref,
                   bfc1_ref, wfc2_ref, bfc2_ref, out_ref, gx_buf,
                   *, gate_dtype=jnp.float32):
    # ids_ref:   (T*Bp, 1) int32  token ids, t-major (row t*Bp+b = text[b, t])
    # len_ref:   (Bp, 1)  int32   valid lengths (0 for padded batch rows)
    # gtab_ref:  (Vp, 4H) f32     embedding @ W_ih^T, packed gates, pad rows 0
    # gbias_ref: (1, 4H)  f32     b_ih + b_hh, packed gate order
    # whh_ref:   (H, 4H)  bf16    W_hh^T, packed gate order
    # wfc1_ref:  (H, FCP) bf16    W_fc1^T, zero pad cols
    # bfc1_ref:  (1, FCP) f32     zero pad cols
    # wfc2_ref:  (1, FCP) f32     fc2 weight as a row, zero pad cols
    # bfc2_ref:  (1,)     f32     in SMEM
    # out_ref:   (Bp, 1)  f32
    # gx_buf:    (T*Bp, 4H) f32   VMEM scratch: x @ W_ih^T + b for all steps
    TB = ids_ref.shape[0]
    Bp = len_ref.shape[0]
    T = TB // Bp
    H = whh_ref.shape[0]
    Vp = gtab_ref.shape[0]

    # ---- fused embedding gather + input projection (off the serial chain) --
    # gx[t*Bp + b] = G[token[b, t]] + bias, via a one-hot matmul on the MXU.
    lane_v = lax.broadcasted_iota(jnp.int32, (TB, Vp), 1)
    onehot = (lane_v == ids_ref[...]).astype(jnp.float32)          # (TB, Vp)
    gx_buf[...] = jnp.dot(onehot, gtab_ref[...],
                          preferred_element_type=jnp.float32) + gbias_ref[...]

    # ---- hoisted loop invariants (JAX does not CSE broadcast_in_dim) -------
    len_b = jnp.broadcast_to(len_ref[...], (Bp, H))                # (Bp, H)
    o_lane = lax.broadcasted_iota(jnp.int32, (Bp, 2 * H), 1) < H   # o vs g lanes

    h0 = jnp.zeros((Bp, H), jnp.float32)
    c0 = jnp.zeros((Bp, H), jnp.float32)

    def step(t, carry):
        h, c = carry
        row0 = pl.multiple_of(t * Bp, 8)
        # Only the h-recurrence stays on the serial critical chain; W_hh is
        # re-read from VMEM each step (vector loads are cheap) instead of
        # living in vregs across the whole unrolled loop.
        gates = gx_buf[pl.ds(row0, Bp), :] + jnp.dot(
            h.astype(jnp.bfloat16), whh_ref[...],
            preferred_element_type=jnp.float32)                    # (Bp, 4H)
        # Slab [i|f]: one full-vreg sigmoid.  Slab [o|g]: sigmoid/tanh blended
        # with the hoisted lane mask.  128-lane-aligned slices = free views.
        slab_if = gates[:, 0:2 * H].astype(gate_dtype)
        slab_og = gates[:, 2 * H:4 * H].astype(gate_dtype)
        act_if = jax.nn.sigmoid(slab_if)                           # [i | f]
        act_og = jnp.where(o_lane, jax.nn.sigmoid(slab_og),
                           jnp.tanh(slab_og))                      # [o | g]
        i_g = act_if[:, 0:H].astype(jnp.float32)
        f_g = act_if[:, H:2 * H].astype(jnp.float32)
        o_g = act_og[:, 0:H].astype(jnp.float32)
        g_g = act_og[:, H:2 * H].astype(jnp.float32)
        c_new = f_g * c + i_g * g_g                                # f32 state
        h_new = o_g * jnp.tanh(c_new)
        mask = t < len_b                 # pack_padded_sequence masking
        return jnp.where(mask, h_new, h), jnp.where(mask, c_new, c)

    # T is static and small: fully unroll so the LLO scheduler can overlap
    # each step's MXU push with the previous step's VPU/EUP gate math.
    h, _ = lax.fori_loop(0, T, step, (h0, c0), unroll=True)

    # ---- epilogue: fc1 -> relu -> fc2 -> sigmoid ----------------------------
    z1 = jnp.maximum(
        jnp.dot(h.astype(jnp.bfloat16), wfc1_ref[...],
                preferred_element_type=jnp.float32) + bfc1_ref[...],
        0.0)                                                       # (Bp, FCP)
    # fc2 (out_features=1): VPU multiply + lane reduction, not an MXU pass.
    z2 = jnp.sum(z1 * wfc2_ref[...], axis=-1, keepdims=True) + bfc2_ref[0]
    out_ref[...] = jax.nn.sigmoid(z2)


def init_params(key):
    ks = jax.random.split(key, 8)
    k_lstm = 1.0 / jnp.sqrt(RNN_HIDDEN)
    k_fc1 = 1.0 / jnp.sqrt(RNN_HIDDEN)
    k_fc2 = 1.0 / jnp.sqrt(FC_HIDDEN)

    emb = jax.random.normal(ks[0], (VOCAB_SIZE, EMBED_DIM), jnp.float32)
    emb = emb.at[0].set(0.0)            # padding_idx=0

    return {
        "embedding": emb,
        "w_ih": jax.random.uniform(ks[1], (4 * RNN_HIDDEN, EMBED_DIM),
                                   jnp.float32, -k_lstm, k_lstm),
        "w_hh": jax.random.uniform(ks[2], (4 * RNN_HIDDEN, RNN_HIDDEN),
                                   jnp.float32, -k_lstm, k_lstm),
        "b_ih": jax.random.uniform(ks[3], (4 * RNN_HIDDEN,),
                                   jnp.float32, -k_lstm, k_lstm),
        "b_hh": jax.random.uniform(ks[4], (4 * RNN_HIDDEN,),
                                   jnp.float32, -k_lstm, k_lstm),
        "w_fc1": jax.random.uniform(ks[5], (FC_HIDDEN, RNN_HIDDEN),
                                    jnp.float32, -k_fc1, k_fc1),
        "b_fc1": jnp.zeros((FC_HIDDEN,), jnp.float32),
        "w_fc2": jax.random.uniform(ks[6], (1, FC_HIDDEN),
                                    jnp.float32, -k_fc2, k_fc2),
        "b_fc2": jnp.zeros((1,), jnp.float32),
    }


def prepare_params(params):
    """One-time packing: gate reorder [i,f,o,g], fused gather table, bf16."""
    H = RNN_HIDDEN

    def pack_gate_cols(w_t):
        # (in, 4H) in PyTorch gate order [i, f, g, o] -> packed [i, f, o, g]
        i_, f_, g_, o_ = (w_t[:, k * H:(k + 1) * H] for k in range(4))
        return jnp.concatenate([i_, f_, o_, g_], axis=1)

    w_ih_t = pack_gate_cols(params["w_ih"].T)                       # (E, 4H)
    w_hh_t = pack_gate_cols(params["w_hh"].T)                       # (H, 4H)
    bias = pack_gate_cols(
        (params["b_ih"] + params["b_hh"]).reshape(1, -1))           # (1, 4H)

    # Fused embedding-gather + input-projection table:
    #   G[token] = embedding[token] @ W_ih^T  (padding_idx row stays zero),
    # padded to 128 rows so the in-kernel one-hot matmul is a full-lane op.
    g_table = params["embedding"] @ w_ih_t                          # (V, 4H)
    g_table = jnp.zeros((VOCAB_PAD, NUM_GATES * H),
                        jnp.float32).at[:VOCAB_SIZE].set(g_table)

    w_fc1_t = jnp.zeros((H, FC_PAD),
                        jnp.float32).at[:, :FC_HIDDEN].set(params["w_fc1"].T)
    b_fc1 = jnp.zeros((1, FC_PAD),
                      jnp.float32).at[:, :FC_HIDDEN].set(params["b_fc1"])
    w_fc2_row = jnp.zeros((1, FC_PAD), jnp.float32).at[:, :FC_HIDDEN].set(
        params["w_fc2"].reshape(1, -1))

    return {
        "g_table": g_table,                                # (128, 4H) f32
        "g_bias": bias,                                    # (1, 4H)  f32
        "w_hh_t": w_hh_t.astype(jnp.bfloat16),             # (H, 4H)  bf16
        "w_fc1_t": w_fc1_t.astype(jnp.bfloat16),           # (H, 128) bf16
        "b_fc1": b_fc1,                                    # (1, 128) f32
        "w_fc2_row": w_fc2_row,                            # (1, 128) f32
        "b_fc2": params["b_fc2"].reshape(1),               # (1,)     f32
    }


def _gate_nonlin_dtype():
    """bf16 gate nonlinearities on chips with bf16 VPU/EUP (v6e/v7x), else f32."""
    try:
        kind = jax.devices()[0].device_kind.lower()
    except Exception:
        return jnp.float32
    if any(s in kind for s in ("v2", "v3", "v4", "v5")):
        return jnp.float32
    return jnp.bfloat16


@jax.jit
def rnn_forward(text, lengths, prepped):
    B, T = text.shape
    Bp = max(8, -(-B // 8) * 8)                 # pad batch to >= 8 sublanes

    # Only tiny int32 plumbing stays in the wrapper (256 B of ids); the
    # embedding gather and input projection now happen inside the kernel.
    ids = jnp.transpose(text.astype(jnp.int32))                 # (T, B)
    ids = jnp.pad(ids, ((0, 0), (0, Bp - B)))                   # pad rows: token 0
    ids = ids.reshape(T * Bp, 1)                                 # t-major
    lens = jnp.pad(lengths.astype(jnp.int32), (0, Bp - B)).reshape(Bp, 1)

    vmem = lambda: pl.BlockSpec(memory_space=pltpu.MemorySpace.VMEM)
    smem = lambda: pl.BlockSpec(memory_space=pltpu.MemorySpace.SMEM)

    kernel = functools.partial(lstm_fc_kernel, gate_dtype=_gate_nonlin_dtype())

    # TODO(synk): for large B/T, tile the batch with a "parallel" grid axis
    # (2 TCs on v7x), block the gx scratch over T with a BlockSpec, and set
    # vmem_limit_bytes via pltpu.CompilerParams instead of whole-array VMEM
    # residency.
    out = pl.pallas_call(
        kernel,
        out_shape=jax.ShapeDtypeStruct((Bp, 1), jnp.float32),
        in_specs=[vmem()] * 8 + [smem()],
        out_specs=vmem(),
        scratch_shapes=[
            pltpu.VMEM((T * Bp, NUM_GATES * RNN_HIDDEN), jnp.float32)],
    )(
        ids,
        lens,
        prepped["g_table"],
        prepped["g_bias"],
        prepped["w_hh_t"],
        prepped["w_fc1_t"],
        prepped["b_fc1"],
        prepped["w_fc2_row"],
        prepped["b_fc2"],
    )
    return out[:B]


if __name__ == "__main__":
    key = jax.random.PRNGKey(0)
    k_param, k_text = jax.random.split(key)

    params = init_params(k_param)
    prepped = prepare_params(params)   # cached once; reused by every forward

    B, T = 2, 8
    text = jax.random.randint(k_text, (B, T), 1, VOCAB_SIZE, dtype=jnp.int32)
    lengths = jnp.array([8, 5], dtype=jnp.int32)
    # zero out padded positions (as a padded batch would look)
    pad_mask = jnp.arange(T)[None, :] < lengths[:, None]
    text = jnp.where(pad_mask, text, 0)

    out = rnn_forward(text, lengths, prepped)
    jax.block_until_ready(out)
    assert out.shape == (B, 1)
    print("KERNEL_OK")
</pallas_src>

<mosaic_0001>
module attributes {stable_mosaic.version = 11 : i64} {
  func.func @lstm_fc_kernel(%arg0: memref<64x1xi32, #tpu.memory_space<vmem>>, %arg1: memref<8x1xi32, #tpu.memory_space<vmem>>, %arg2: memref<128x256xf32, #tpu.memory_space<vmem>>, %arg3: memref<1x256xf32, #tpu.memory_space<vmem>>, %arg4: memref<64x256xbf16, #tpu.memory_space<vmem>>, %arg5: memref<64x128xbf16, #tpu.memory_space<vmem>>, %arg6: memref<1x128xf32, #tpu.memory_space<vmem>>, %arg7: memref<1x128xf32, #tpu.memory_space<vmem>>, %arg8: memref<1xf32, #tpu.memory_space<smem>>, %arg9: memref<8x1xf32, #tpu.memory_space<vmem>>, %arg10: memref<64x256xf32, #tpu.memory_space<vmem>>) attributes {dimension_semantics = [], scalar_prefetch = 0 : i64, scratch_operands = 1 : i64, tpu.core_type = #tpu.core_type<tc>} {
    %0 = tpu.iota {dimensions = array<i32: 1>} : vector<64x128xi32>
    %c0 = arith.constant 0 : index
    %c0_0 = arith.constant 0 : index
    %1 = vector.load %arg0[%c0, %c0_0] : memref<64x1xi32, #tpu.memory_space<vmem>>, vector<64x1xi32>
    %2 = vector.broadcast %1 : vector<64x1xi32> to vector<64x128xi32>
    %3 = arith.cmpi eq, %0, %2 : vector<64x128xi32>
    %4 = arith.extui %3 : vector<64x128xi1> to vector<64x128xi32>
    %5 = arith.sitofp %4 : vector<64x128xi32> to vector<64x128xf32>
    %c0_1 = arith.constant 0 : index
    %c0_2 = arith.constant 0 : index
    %6 = vector.load %arg2[%c0_1, %c0_2] : memref<128x256xf32, #tpu.memory_space<vmem>>, vector<128x256xf32>
    %cst = arith.constant dense<0.000000e+00> : vector<64x256xf32>
    %7 = tpu.matmul %5, %6, %cst {dimension_numbers = #tpu.dot_dimension_numbers<[1], [0], [0], [1], [0, 0, 1, 1], [], []>} : vector<64x128xf32>, vector<128x256xf32>, vector<64x256xf32> -> vector<64x256xf32>
    %c0_3 = arith.constant 0 : index
    %c0_4 = arith.constant 0 : index
    %8 = vector.load %arg3[%c0_3, %c0_4] : memref<1x256xf32, #tpu.memory_space<vmem>>, vector<1x256xf32>
    %9 = vector.broadcast %8 : vector<1x256xf32> to vector<64x256xf32>
    %10 = arith.addf %7, %9 : vector<64x256xf32>
    %c0_5 = arith.constant 0 : index
    %c0_6 = arith.constant 0 : index
    %11 = vector.load %arg10[%c0_5, %c0_6] : memref<64x256xf32, #tpu.memory_space<vmem>>, vector<64x256xf32>
    tpu.vector_store %arg10[%c0_5, %c0_6], %10 {strides = array<i32>} : memref<64x256xf32, #tpu.memory_space<vmem>>, vector<64x256xf32>,
    %c0_7 = arith.constant 0 : index
    %c0_8 = arith.constant 0 : index
    %12 = vector.load %arg1[%c0_7, %c0_8] : memref<8x1xi32, #tpu.memory_space<vmem>>, vector<8x1xi32>
    %13 = vector.shape_cast %12 : vector<8x1xi32> to vector<8x1xi32>
    %14 = vector.broadcast %13 : vector<8x1xi32> to vector<8x64xi32>
    %15 = tpu.iota {dimensions = array<i32: 1>} : vector<8x128xi32>
    %c64_i32 = arith.constant 64 : i32
    %16 = vector.broadcast %c64_i32 : i32 to vector<8x128xi32>
    %17 = arith.cmpi slt, %15, %16 : vector<8x128xi32>
    %cst_9 = arith.constant 0.000000e+00 : f32
    %18 = vector.broadcast %cst_9 : f32 to vector<8x64xf32>
    %cst_10 = arith.constant 0.000000e+00 : f32
    %19 = vector.broadcast %cst_10 : f32 to vector<8x64xf32>
    %c0_i32 = arith.constant 0 : i32
    %c8_i32 = arith.constant 8 : i32
    %20 = arith.muli %c0_i32, %c8_i32 : i32
    %21 = tpu.assume_multiple %20, 8 : i32
    %22 = arith.index_cast %21 : i32 to index
    %c0_11 = arith.constant 0 : index
    %23 = vector.load %arg10[%22, %c0_11] : memref<64x256xf32, #tpu.memory_space<vmem>>, vector<8x256xf32>
    %24 = arith.truncf %18 : vector<8x64xf32> to vector<8x64xbf16>
    %c0_12 = arith.constant 0 : index
    %c0_13 = arith.constant 0 : index
    %25 = vector.load %arg4[%c0_12, %c0_13] : memref<64x256xbf16, #tpu.memory_space<vmem>>, vector<64x256xbf16>
    %cst_14 = arith.constant dense<0.000000e+00> : vector<8x256xf32>
    %26 = tpu.matmul %24, %25, %cst_14 {dimension_numbers = #tpu.dot_dimension_numbers<[1], [0], [0], [1], [0, 0, 1, 1], [], []>} : vector<8x64xbf16>, vector<64x256xbf16>, vector<8x256xf32> -> vector<8x256xf32>
    %27 = arith.addf %23, %26 : vector<8x256xf32>
    %28 = vector.extract_strided_slice %27 {offsets = [0, 0], sizes = [8, 128], strides = [1, 1]} : vector<8x256xf32> to vector<8x128xf32>
    %29 = arith.truncf %28 : vector<8x128xf32> to vector<8x128xbf16>
    %30 = vector.extract_strided_slice %27 {offsets = [0, 128], sizes = [8, 128], strides = [1, 1]} : vector<8x256xf32> to vector<8x128xf32>
    %31 = arith.truncf %30 : vector<8x128xf32> to vector<8x128xbf16>
    %32 = arith.negf %29 : vector<8x128xbf16>
    %33 = math.exp %32 : vector<8x128xbf16>
    %cst_15 = arith.constant 1.000000e+00 : bf16
    %34 = vector.broadcast %cst_15 : bf16 to vector<8x128xbf16>
    %35 = arith.addf %34, %33 : vector<8x128xbf16>
    %36 = arith.divf %34, %35 : vector<8x128xbf16>
    %37 = arith.negf %31 : vector<8x128xbf16>
    %38 = math.exp %37 : vector<8x128xbf16>
    %cst_16 = arith.constant 1.000000e+00 : bf16
    %39 = vector.broadcast %cst_16 : bf16 to vector<8x128xbf16>
    %40 = arith.addf %39, %38 : vector<8x128xbf16>
    %41 = arith.divf %39, %40 : vector<8x128xbf16>
    %42 = math.tanh %31 : vector<8x128xbf16>
    %43 = arith.select %17, %41, %42 : vector<8x128xi1>, vector<8x128xbf16>
    %44 = vector.extract_strided_slice %36 {offsets = [0, 0], sizes = [8, 64], strides = [1, 1]} : vector<8x128xbf16> to vector<8x64xbf16>
    %45 = arith.extf %44 : vector<8x64xbf16> to vector<8x64xf32>
    %46 = vector.extract_strided_slice %36 {offsets = [0, 64], sizes = [8, 64], strides = [1, 1]} : vector<8x128xbf16> to vector<8x64xbf16>
    %47 = arith.extf %46 : vector<8x64xbf16> to vector<8x64xf32>
    %48 = vector.extract_strided_slice %43 {offsets = [0, 0], sizes = [8, 64], strides = [1, 1]} : vector<8x128xbf16> to vector<8x64xbf16>
    %49 = arith.extf %48 : vector<8x64xbf16> to vector<8x64xf32>
    %50 = vector.extract_strided_slice %43 {offsets = [0, 64], sizes = [8, 64], strides = [1, 1]} : vector<8x128xbf16> to vector<8x64xbf16>
    %51 = arith.extf %50 : vector<8x64xbf16> to vector<8x64xf32>
    %52 = arith.mulf %47, %19 : vector<8x64xf32>
    %53 = arith.mulf %45, %51 : vector<8x64xf32>
    %54 = arith.addf %52, %53 : vector<8x64xf32>
    %55 = math.tanh %54 : vector<8x64xf32>
    %56 = arith.mulf %49, %55 : vector<8x64xf32>
    %57 = vector.broadcast %c0_i32 : i32 to vector<8x64xi32>
    %58 = arith.cmpi slt, %57, %14 : vector<8x64xi32>
    %59 = arith.select %58, %56, %18 : vector<8x64xi1>, vector<8x64xf32>
    %60 = arith.select %58, %54, %19 : vector<8x64xi1>, vector<8x64xf32>
    %c1_i32 = arith.constant 1 : i32
    %c8_i32_17 = arith.constant 8 : i32
    %61 = arith.muli %c1_i32, %c8_i32_17 : i32
    %62 = tpu.assume_multiple %61, 8 : i32
    %63 = arith.index_cast %62 : i32 to index
    %c0_18 = arith.constant 0 : index
    %64 = vector.load %arg10[%63, %c0_18] : memref<64x256xf32, #tpu.memory_space<vmem>>, vector<8x256xf32>
    %65 = arith.truncf %59 : vector<8x64xf32> to vector<8x64xbf16>
    %c0_19 = arith.constant 0 : index
    %c0_20 = arith.constant 0 : index
    %66 = vector.load %arg4[%c0_19, %c0_20] : memref<64x256xbf16, #tpu.memory_space<vmem>>, vector<64x256xbf16>
    %cst_21 = arith.constant dense<0.000000e+00> : vector<8x256xf32>
    %67 = tpu.matmul %65, %66, %cst_21 {dimension_numbers = #tpu.dot_dimension_numbers<[1], [0], [0], [1], [0, 0, 1, 1], [], []>} : vector<8x64xbf16>, vector<64x256xbf16>, vector<8x256xf32> -> vector<8x256xf32>
    %68 = arith.addf %64, %67 : vector<8x256xf32>
    %69 = vector.extract_strided_slice %68 {offsets = [0, 0], sizes = [8, 128], strides = [1, 1]} : vector<8x256xf32> to vector<8x128xf32>
    %70 = arith.truncf %69 : vector<8x128xf32> to vector<8x128xbf16>
    %71 = vector.extract_strided_slice %68 {offsets = [0, 128], sizes = [8, 128], strides = [1, 1]} : vector<8x256xf32> to vector<8x128xf32>
    %72 = arith.truncf %71 : vector<8x128xf32> to vector<8x128xbf16>
    %73 = arith.negf %70 : vector<8x128xbf16>
    %74 = math.exp %73 : vector<8x128xbf16>
    %cst_22 = arith.constant 1.000000e+00 : bf16
    %75 = vector.broadcast %cst_22 : bf16 to vector<8x128xbf16>
    %76 = arith.addf %75, %74 : vector<8x128xbf16>
    %77 = arith.divf %75, %76 : vector<8x128xbf16>
    %78 = arith.negf %72 : vector<8x128xbf16>
    %79 = math.exp %78 : vector<8x128xbf16>
    %cst_23 = arith.constant 1.000000e+00 : bf16
    %80 = vector.broadcast %cst_23 : bf16 to vector<8x128xbf16>
    %81 = arith.addf %80, %79 : vector<8x128xbf16>
    %82 = arith.divf %80, %81 : vector<8x128xbf16>
    %83 = math.tanh %72 : vector<8x128xbf16>
    %84 = arith.select %17, %82, %83 : vector<8x128xi1>, vector<8x128xbf16>
    %85 = vector.extract_strided_slice %77 {offsets = [0, 0], sizes = [8, 64], strides = [1, 1]} : vector<8x128xbf16> to vector<8x64xbf16>
    %86 = arith.extf %85 : vector<8x64xbf16> to vector<8x64xf32>
    %87 = vector.extract_strided_slice %77 {offsets = [0, 64], sizes = [8, 64], strides = [1, 1]} : vector<8x128xbf16> to vector<8x64xbf16>
    %88 = arith.extf %87 : vector<8x64xbf16> to vector<8x64xf32>
    %89 = vector.extract_strided_slice %84 {offsets = [0, 0], sizes = [8, 64], strides = [1, 1]} : vector<8x128xbf16> to vector<8x64xbf16>
    %90 = arith.extf %89 : vector<8x64xbf16> to vector<8x64xf32>
    %91 = vector.extract_strided_slice %84 {offsets = [0, 64], sizes = [8, 64], strides = [1, 1]} : vector<8x128xbf16> to vector<8x64xbf16>
    %92 = arith.extf %91 : vector<8x64xbf16> to vector<8x64xf32>
    %93 = arith.mulf %88, %60 : vector<8x64xf32>
    %94 = arith.mulf %86, %92 : vector<8x64xf32>
    %95 = arith.addf %93, %94 : vector<8x64xf32>
    %96 = math.tanh %95 : vector<8x64xf32>
    %97 = arith.mulf %90, %96 : vector<8x64xf32>
    %98 = vector.broadcast %c1_i32 : i32 to vector<8x64xi32>
    %99 = arith.cmpi slt, %98, %14 : vector<8x64xi32>
    %100 = arith.select %99, %97, %59 : vector<8x64xi1>, vector<8x64xf32>
    %101 = arith.select %99, %95, %60 : vector<8x64xi1>, vector<8x64xf32>
    %c2_i32 = arith.constant 2 : i32
    %c8_i32_24 = arith.constant 8 : i32
    %102 = arith.muli %c2_i32, %c8_i32_24 : i32
    %103 = tpu.assume_multiple %102, 8 : i32
    %104 = arith.index_cast %103 : i32 to index
    %c0_25 = arith.constant 0 : index
    %105 = vector.load %arg10[%104, %c0_25] : memref<64x256xf32, #tpu.memory_space<vmem>>, vector<8x256xf32>
    %106 = arith.truncf %100 : vector<8x64xf32> to vector<8x64xbf16>
    %c0_26 = arith.constant 0 : index
    %c0_27 = arith.constant 0 : index
    %107 = vector.load %arg4[%c0_26, %c0_27] : memref<64x256xbf16, #tpu.memory_space<vmem>>, vector<64x256xbf16>
    %cst_28 = arith.constant dense<0.000000e+00> : vector<8x256xf32>
    %108 = tpu.matmul %106, %107, %cst_28 {dimension_numbers = #tpu.dot_dimension_numbers<[1], [0], [0], [1], [0, 0, 1, 1], [], []>} : vector<8x64xbf16>, vector<64x256xbf16>, vector<8x256xf32> -> vector<8x256xf32>
    %109 = arith.addf %105, %108 : vector<8x256xf32>
    %110 = vector.extract_strided_slice %109 {offsets = [0, 0], sizes = [8, 128], strides = [1, 1]} : vector<8x256xf32> to vector<8x128xf32>
    %111 = arith.truncf %110 : vector<8x128xf32> to vector<8x128xbf16>
    %112 = vector.extract_strided_slice %109 {offsets = [0, 128], sizes = [8, 128], strides = [1, 1]} : vector<8x256xf32> to vector<8x128xf32>
    %113 = arith.truncf %112 : vector<8x128xf32> to vector<8x128xbf16>
    %114 = arith.negf %111 : vector<8x128xbf16>
    %115 = math.exp %114 : vector<8x128xbf16>
    %cst_29 = arith.constant 1.000000e+00 : bf16
    %116 = vector.broadcast %cst_29 : bf16 to vector<8x128xbf16>
    %117 = arith.addf %116, %115 : vector<8x128xbf16>
    %118 = arith.divf %116, %117 : vector<8x128xbf16>
    %119 = arith.negf %113 : vector<8x128xbf16>
    %120 = math.exp %119 : vector<8x128xbf16>
    %cst_30 = arith.constant 1.000000e+00 : bf16
    %121 = vector.broadcast %cst_30 : bf16 to vector<8x128xbf16>
    %122 = arith.addf %121, %120 : vector<8x128xbf16>
    %123 = arith.divf %121, %122 : vector<8x128xbf16>
    %124 = math.tanh %113 : vector<8x128xbf16>
    %125 = arith.select %17, %123, %124 : vector<8x128xi1>, vector<8x128xbf16>
    %126 = vector.extract_strided_slice %118 {offsets = [0, 0], sizes = [8, 64], strides = [1, 1]} : vector<8x128xbf16> to vector<8x64xbf16>
    %127 = arith.extf %126 : vector<8x64xbf16> to vector<8x64xf32>
    %128 = vector.extract_strided_slice %118 {offsets = [0, 64], sizes = [8, 64], strides = [1, 1]} : vector<8x128xbf16> to vector<8x64xbf16>
    %129 = arith.extf %128 : vector<8x64xbf16> to vector<8x64xf32>
    %130 = vector.extract_strided_slice %125 {offsets = [0, 0], sizes = [8, 64], strides = [1, 1]} : vector<8x128xbf16> to vector<8x64xbf16>
    %131 = arith.extf %130 : vector<8x64xbf16> to vector<8x64xf32>
    %132 = vector.extract_strided_slice %125 {offsets = [0, 64], sizes = [8, 64], strides = [1, 1]} : vector<8x128xbf16> to vector<8x64xbf16>
    %133 = arith.extf %132 : vector<8x64xbf16> to vector<8x64xf32>
    %134 = arith.mulf %129, %101 : vector<8x64xf32>
    %135 = arith.mulf %127, %133 : vector<8x64xf32>
    %136 = arith.addf %134, %135 : vector<8x64xf32>
    %137 = math.tanh %136 : vector<8x64xf32>
    %138 = arith.mulf %131, %137 : vector<8x64xf32>
    %139 = vector.broadcast %c2_i32 : i32 to vector<8x64xi32>
    %140 = arith.cmpi slt, %139, %14 : vector<8x64xi32>
    %141 = arith.select %140, %138, %100 : vector<8x64xi1>, vector<8x64xf32>
    %142 = arith.select %140, %136, %101 : vector<8x64xi1>, vector<8x64xf32>
    %c3_i32 = arith.constant 3 : i32
    %c8_i32_31 = arith.constant 8 : i32
    %143 = arith.muli %c3_i32, %c8_i32_31 : i32
    %144 = tpu.assume_multiple %143, 8 : i32
    %145 = arith.index_cast %144 : i32 to index
    %c0_32 = arith.constant 0 : index
    %146 = vector.load %arg10[%145, %c0_32] : memref<64x256xf32, #tpu.memory_space<vmem>>, vector<8x256xf32>
    %147 = arith.truncf %141 : vector<8x64xf32> to vector<8x64xbf16>
    %c0_33 = arith.constant 0 : index
    %c0_34 = arith.constant 0 : index
    %148 = vector.load %arg4[%c0_33, %c0_34] : memref<64x256xbf16, #tpu.memory_space<vmem>>, vector<64x256xbf16>
    %cst_35 = arith.constant dense<0.000000e+00> : vector<8x256xf32>
    %149 = tpu.matmul %147, %148, %cst_35 {dimension_numbers = #tpu.dot_dimension_numbers<[1], [0], [0], [1], [0, 0, 1, 1], [], []>} : vector<8x64xbf16>, vector<64x256xbf16>, vector<8x256xf32> -> vector<8x256xf32>
    %150 = arith.addf %146, %149 : vector<8x256xf32>
    %151 = vector.extract_strided_slice %150 {offsets = [0, 0], sizes = [8, 128], strides = [1, 1]} : vector<8x256xf32> to vector<8x128xf32>
    %152 = arith.truncf %151 : vector<8x128xf32> to vector<8x128xbf16>
    %153 = vector.extract_strided_slice %150 {offsets = [0, 128], sizes = [8, 128], strides = [1, 1]} : vector<8x256xf32> to vector<8x128xf32>
    %154 = arith.truncf %153 : vector<8x128xf32> to vector<8x128xbf16>
    %155 = arith.negf %152 : vector<8x128xbf16>
    %156 = math.exp %155 : vector<8x128xbf16>
    %cst_36 = arith.constant 1.000000e+00 : bf16
    %157 = vector.broadcast %cst_36 : bf16 to vector<8x128xbf16>
    %158 = arith.addf %157, %156 : vector<8x128xbf16>
    %159 = arith.divf %157, %158 : vector<8x128xbf16>
    %160 = arith.negf %154 : vector<8x128xbf16>
    %161 = math.exp %160 : vector<8x128xbf16>
    %cst_37 = arith.constant 1.000000e+00 : bf16
    %162 = vector.broadcast %cst_37 : bf16 to vector<8x128xbf16>
    %163 = arith.addf %162, %161 : vector<8x128xbf16>
    %164 = arith.divf %162, %163 : vector<8x128xbf16>
    %165 = math.tanh %154 : vector<8x128xbf16>
    %166 = arith.select %17, %164, %165 : vector<8x128xi1>, vector<8x128xbf16>
    %167 = vector.extract_strided_slice %159 {offsets = [0, 0], sizes = [8, 64], strides = [1, 1]} : vector<8x128xbf16> to vector<8x64xbf16>
    %168 = arith.extf %167 : vector<8x64xbf16> to vector<8x64xf32>
    %169 = vector.extract_strided_slice %159 {offsets = [0, 64], sizes = [8, 64], strides = [1, 1]} : vector<8x128xbf16> to vector<8x64xbf16>
    %170 = arith.extf %169 : vector<8x64xbf16> to vector<8x64xf32>
    %171 = vector.extract_strided_slice %166 {offsets = [0, 0], sizes = [8, 64], strides = [1, 1]} : vector<8x128xbf16> to vector<8x64xbf16>
    %172 = arith.extf %171 : vector<8x64xbf16> to vector<8x64xf32>
    %173 = vector.extract_strided_slice %166 {offsets = [0, 64], sizes = [8, 64], strides = [1, 1]} : vector<8x128xbf16> to vector<8x64xbf16>
    %174 = arith.extf %173 : vector<8x64xbf16> to vector<8x64xf32>
    %175 = arith.mulf %170, %142 : vector<8x64xf32>
    %176 = arith.mulf %168, %174 : vector<8x64xf32>
    %177 = arith.addf %175, %176 : vector<8x64xf32>
    %178 = math.tanh %177 : vector<8x64xf32>
    %179 = arith.mulf %172, %178 : vector<8x64xf32>
    %180 = vector.broadcast %c3_i32 : i32 to vector<8x64xi32>
    %181 = arith.cmpi slt, %180, %14 : vector<8x64xi32>
    %182 = arith.select %181, %179, %141 : vector<8x64xi1>, vector<8x64xf32>
    %183 = arith.select %181, %177, %142 : vector<8x64xi1>, vector<8x64xf32>
    %c4_i32 = arith.constant 4 : i32
    %c8_i32_38 = arith.constant 8 : i32
    %184 = arith.muli %c4_i32, %c8_i32_38 : i32
    %185 = tpu.assume_multiple %184, 8 : i32
    %186 = arith.index_cast %185 : i32 to index
    %c0_39 = arith.constant 0 : index
    %187 = vector.load %arg10[%186, %c0_39] : memref<64x256xf32, #tpu.memory_space<vmem>>, vector<8x256xf32>
    %188 = arith.truncf %182 : vector<8x64xf32> to vector<8x64xbf16>
    %c0_40 = arith.constant 0 : index
    %c0_41 = arith.constant 0 : index
    %189 = vector.load %arg4[%c0_40, %c0_41] : memref<64x256xbf16, #tpu.memory_space<vmem>>, vector<64x256xbf16>
    %cst_42 = arith.constant dense<0.000000e+00> : vector<8x256xf32>
    %190 = tpu.matmul %188, %189, %cst_42 {dimension_numbers = #tpu.dot_dimension_numbers<[1], [0], [0], [1], [0, 0, 1, 1], [], []>} : vector<8x64xbf16>, vector<64x256xbf16>, vector<8x256xf32> -> vector<8x256xf32>
    %191 = arith.addf %187, %190 : vector<8x256xf32>
    %192 = vector.extract_strided_slice %191 {offsets = [0, 0], sizes = [8, 128], strides = [1, 1]} : vector<8x256xf32> to vector<8x128xf32>
    %193 = arith.truncf %192 : vector<8x128xf32> to vector<8x128xbf16>
    %194 = vector.extract_strided_slice %191 {offsets = [0, 128], sizes = [8, 128], strides = [1, 1]} : vector<8x256xf32> to vector<8x128xf32>
    %195 = arith.truncf %194 : vector<8x128xf32> to vector<8x128xbf16>
    %196 = arith.negf %193 : vector<8x128xbf16>
    %197 = math.exp %196 : vector<8x128xbf16>
    %cst_43 = arith.constant 1.000000e+00 : bf16
    %198 = vector.broadcast %cst_43 : bf16 to vector<8x128xbf16>
    %199 = arith.addf %198, %197 : vector<8x128xbf16>
    %200 = arith.divf %198, %199 : vector<8x128xbf16>
    %201 = arith.negf %195 : vector<8x128xbf16>
    %202 = math.exp %201 : vector<8x128xbf16>
    %cst_44 = arith.constant 1.000000e+00 : bf16
    %203 = vector.broadcast %cst_44 : bf16 to vector<8x128xbf16>
    %204 = arith.addf %203, %202 : vector<8x128xbf16>
    %205 = arith.divf %203, %204 : vector<8x128xbf16>
    %206 = math.tanh %195 : vector<8x128xbf16>
    %207 = arith.select %17, %205, %206 : vector<8x128xi1>, vector<8x128xbf16>
    %208 = vector.extract_strided_slice %200 {offsets = [0, 0], sizes = [8, 64], strides = [1, 1]} : vector<8x128xbf16> to vector<8x64xbf16>
    %209 = arith.extf %208 : vector<8x64xbf16> to vector<8x64xf32>
    %210 = vector.extract_strided_slice %200 {offsets = [0, 64], sizes = [8, 64], strides = [1, 1]} : vector<8x128xbf16> to vector<8x64xbf16>
    %211 = arith.extf %210 : vector<8x64xbf16> to vector<8x64xf32>
    %212 = vector.extract_strided_slice %207 {offsets = [0, 0], sizes = [8, 64], strides = [1, 1]} : vector<8x128xbf16> to vector<8x64xbf16>
    %213 = arith.extf %212 : vector<8x64xbf16> to vector<8x64xf32>
    %214 = vector.extract_strided_slice %207 {offsets = [0, 64], sizes = [8, 64], strides = [1, 1]} : vector<8x128xbf16> to vector<8x64xbf16>
    %215 = arith.extf %214 : vector<8x64xbf16> to vector<8x64xf32>
    %216 = arith.mulf %211, %183 : vector<8x64xf32>
    %217 = arith.mulf %209, %215 : vector<8x64xf32>
    %218 = arith.addf %216, %217 : vector<8x64xf32>
    %219 = math.tanh %218 : vector<8x64xf32>
    %220 = arith.mulf %213, %219 : vector<8x64xf32>
    %221 = vector.broadcast %c4_i32 : i32 to vector<8x64xi32>
    %222 = arith.cmpi slt, %221, %14 : vector<8x64xi32>
    %223 = arith.select %222, %220, %182 : vector<8x64xi1>, vector<8x64xf32>
    %224 = arith.select %222, %218, %183 : vector<8x64xi1>, vector<8x64xf32>
    %c5_i32 = arith.constant 5 : i32
    %c8_i32_45 = arith.constant 8 : i32
    %225 = arith.muli %c5_i32, %c8_i32_45 : i32
    %226 = tpu.assume_multiple %225, 8 : i32
    %227 = arith.index_cast %226 : i32 to index
    %c0_46 = arith.constant 0 : index
    %228 = vector.load %arg10[%227, %c0_46] : memref<64x256xf32, #tpu.memory_space<vmem>>, vector<8x256xf32>
    %229 = arith.truncf %223 : vector<8x64xf32> to vector<8x64xbf16>
    %c0_47 = arith.constant 0 : index
    %c0_48 = arith.constant 0 : index
    %230 = vector.load %arg4[%c0_47, %c0_48] : memref<64x256xbf16, #tpu.memory_space<vmem>>, vector<64x256xbf16>
    %cst_49 = arith.constant dense<0.000000e+00> : vector<8x256xf32>
    %231 = tpu.matmul %229, %230, %cst_49 {dimension_numbers = #tpu.dot_dimension_numbers<[1], [0], [0], [1], [0, 0, 1, 1], [], []>} : vector<8x64xbf16>, vector<64x256xbf16>, vector<8x256xf32> -> vector<8x256xf32>
    %232 = arith.addf %228, %231 : vector<8x256xf32>
    %233 = vector.extract_strided_slice %232 {offsets = [0, 0], sizes = [8, 128], strides = [1, 1]} : vector<8x256xf32> to vector<8x128xf32>
    %234 = arith.truncf %233 : vector<8x128xf32> to vector<8x128xbf16>
    %235 = vector.extract_strided_slice %232 {offsets = [0, 128], sizes = [8, 128], strides = [1, 1]} : vector<8x256xf32> to vector<8x128xf32>
    %236 = arith.truncf %235 : vector<8x128xf32> to vector<8x128xbf16>
    %237 = arith.negf %234 : vector<8x128xbf16>
    %238 = math.exp %237 : vector<8x128xbf16>
    %cst_50 = arith.constant 1.000000e+00 : bf16
    %239 = vector.broadcast %cst_50 : bf16 to vector<8x128xbf16>
    %240 = arith.addf %239, %238 : vector<8x128xbf16>
    %241 = arith.divf %239, %240 : vector<8x128xbf16>
    %242 = arith.negf %236 : vector<8x128xbf16>
    %243 = math.exp %242 : vector<8x128xbf16>
    %cst_51 = arith.constant 1.000000e+00 : bf16
    %244 = vector.broadcast %cst_51 : bf16 to vector<8x128xbf16>
    %245 = arith.addf %244, %243 : vector<8x128xbf16>
    %246 = arith.divf %244, %245 : vector<8x128xbf16>
    %247 = math.tanh %236 : vector<8x128xbf16>
    %248 = arith.select %17, %246, %247 : vector<8x128xi1>, vector<8x128xbf16>
    %249 = vector.extract_strided_slice %241 {offsets = [0, 0], sizes = [8, 64], strides = [1, 1]} : vector<8x128xbf16> to vector<8x64xbf16>
    %250 = arith.extf %249 : vector<8x64xbf16> to vector<8x64xf32>
    %251 = vector.extract_strided_slice %241 {offsets = [0, 64], sizes = [8, 64], strides = [1, 1]} : vector<8x128xbf16> to vector<8x64xbf16>
    %252 = arith.extf %251 : vector<8x64xbf16> to vector<8x64xf32>
    %253 = vector.extract_strided_slice %248 {offsets = [0, 0], sizes = [8, 64], strides = [1, 1]} : vector<8x128xbf16> to vector<8x64xbf16>
    %254 = arith.extf %253 : vector<8x64xbf16> to vector<8x64xf32>
    %255 = vector.extract_strided_slice %248 {offsets = [0, 64], sizes = [8, 64], strides = [1, 1]} : vector<8x128xbf16> to vector<8x64xbf16>
    %256 = arith.extf %255 : vector<8x64xbf16> to vector<8x64xf32>
    %257 = arith.mulf %252, %224 : vector<8x64xf32>
    %258 = arith.mulf %250, %256 : vector<8x64xf32>
    %259 = arith.addf %257, %258 : vector<8x64xf32>
    %260 = math.tanh %259 : vector<8x64xf32>
    %261 = arith.mulf %254, %260 : vector<8x64xf32>
    %262 = vector.broadcast %c5_i32 : i32 to vector<8x64xi32>
    %263 = arith.cmpi slt, %262, %14 : vector<8x64xi32>
    %264 = arith.select %263, %261, %223 : vector<8x64xi1>, vector<8x64xf32>
    %265 = arith.select %263, %259, %224 : vector<8x64xi1>, vector<8x64xf32>
    %c6_i32 = arith.constant 6 : i32
    %c8_i32_52 = arith.constant 8 : i32
    %266 = arith.muli %c6_i32, %c8_i32_52 : i32
    %267 = tpu.assume_multiple %266, 8 : i32
    %268 = arith.index_cast %267 : i32 to index
    %c0_53 = arith.constant 0 : index
    %269 = vector.load %arg10[%268, %c0_53] : memref<64x256xf32, #tpu.memory_space<vmem>>, vector<8x256xf32>
    %270 = arith.truncf %264 : vector<8x64xf32> to vector<8x64xbf16>
    %c0_54 = arith.constant 0 : index
    %c0_55 = arith.constant 0 : index
    %271 = vector.load %arg4[%c0_54, %c0_55] : memref<64x256xbf16, #tpu.memory_space<vmem>>, vector<64x256xbf16>
    %cst_56 = arith.constant dense<0.000000e+00> : vector<8x256xf32>
    %272 = tpu.matmul %270, %271, %cst_56 {dimension_numbers = #tpu.dot_dimension_numbers<[1], [0], [0], [1], [0, 0, 1, 1], [], []>} : vector<8x64xbf16>, vector<64x256xbf16>, vector<8x256xf32> -> vector<8x256xf32>
    %273 = arith.addf %269, %272 : vector<8x256xf32>
    %274 = vector.extract_strided_slice %273 {offsets = [0, 0], sizes = [8, 128], strides = [1, 1]} : vector<8x256xf32> to vector<8x128xf32>
    %275 = arith.truncf %274 : vector<8x128xf32> to vector<8x128xbf16>
    %276 = vector.extract_strided_slice %273 {offsets = [0, 128], sizes = [8, 128], strides = [1, 1]} : vector<8x256xf32> to vector<8x128xf32>
    %277 = arith.truncf %276 : vector<8x128xf32> to vector<8x128xbf16>
    %278 = arith.negf %275 : vector<8x128xbf16>
    %279 = math.exp %278 : vector<8x128xbf16>
    %cst_57 = arith.constant 1.000000e+00 : bf16
    %280 = vector.broadcast %cst_57 : bf16 to vector<8x128xbf16>
    %281 = arith.addf %280, %279 : vector<8x128xbf16>
    %282 = arith.divf %280, %281 : vector<8x128xbf16>
    %283 = arith.negf %277 : vector<8x128xbf16>
    %284 = math.exp %283 : vector<8x128xbf16>
    %cst_58 = arith.constant 1.000000e+00 : bf16
    %285 = vector.broadcast %cst_58 : bf16 to vector<8x128xbf16>
    %286 = arith.addf %285, %284 : vector<8x128xbf16>
    %287 = arith.divf %285, %286 : vector<8x128xbf16>
    %288 = math.tanh %277 : vector<8x128xbf16>
    %289 = arith.select %17, %287, %288 : vector<8x128xi1>, vector<8x128xbf16>
    %290 = vector.extract_strided_slice %282 {offsets = [0, 0], sizes = [8, 64], strides = [1, 1]} : vector<8x128xbf16> to vector<8x64xbf16>
    %291 = arith.extf %290 : vector<8x64xbf16> to vector<8x64xf32>
    %292 = vector.extract_strided_slice %282 {offsets = [0, 64], sizes = [8, 64], strides = [1, 1]} : vector<8x128xbf16> to vector<8x64xbf16>
    %293 = arith.extf %292 : vector<8x64xbf16> to vector<8x64xf32>
    %294 = vector.extract_strided_slice %289 {offsets = [0, 0], sizes = [8, 64], strides = [1, 1]} : vector<8x128xbf16> to vector<8x64xbf16>
    %295 = arith.extf %294 : vector<8x64xbf16> to vector<8x64xf32>
    %296 = vector.extract_strided_slice %289 {offsets = [0, 64], sizes = [8, 64], strides = [1, 1]} : vector<8x128xbf16> to vector<8x64xbf16>
    %297 = arith.extf %296 : vector<8x64xbf16> to vector<8x64xf32>
    %298 = arith.mulf %293, %265 : vector<8x64xf32>
    %299 = arith.mulf %291, %297 : vector<8x64xf32>
    %300 = arith.addf %298, %299 : vector<8x64xf32>
    %301 = math.tanh %300 : vector<8x64xf32>
    %302 = arith.mulf %295, %301 : vector<8x64xf32>
    %303 = vector.broadcast %c6_i32 : i32 to vector<8x64xi32>
    %304 = arith.cmpi slt, %303, %14 : vector<8x64xi32>
    %305 = arith.select %304, %302, %264 : vector<8x64xi1>, vector<8x64xf32>
    %306 = arith.select %304, %300, %265 : vector<8x64xi1>, vector<8x64xf32>
    %c7_i32 = arith.constant 7 : i32
    %c8_i32_59 = arith.constant 8 : i32
    %307 = arith.muli %c7_i32, %c8_i32_59 : i32
    %308 = tpu.assume_multiple %307, 8 : i32
    %309 = arith.index_cast %308 : i32 to index
    %c0_60 = arith.constant 0 : index
    %310 = vector.load %arg10[%309, %c0_60] : memref<64x256xf32, #tpu.memory_space<vmem>>, vector<8x256xf32>
    %311 = arith.truncf %305 : vector<8x64xf32> to vector<8x64xbf16>
    %c0_61 = arith.constant 0 : index
    %c0_62 = arith.constant 0 : index
    %312 = vector.load %arg4[%c0_61, %c0_62] : memref<64x256xbf16, #tpu.memory_space<vmem>>, vector<64x256xbf16>
    %cst_63 = arith.constant dense<0.000000e+00> : vector<8x256xf32>
    %313 = tpu.matmul %311, %312, %cst_63 {dimension_numbers = #tpu.dot_dimension_numbers<[1], [0], [0], [1], [0, 0, 1, 1], [], []>} : vector<8x64xbf16>, vector<64x256xbf16>, vector<8x256xf32> -> vector<8x256xf32>
    %314 = arith.addf %310, %313 : vector<8x256xf32>
    %315 = vector.extract_strided_slice %314 {offsets = [0, 0], sizes = [8, 128], strides = [1, 1]} : vector<8x256xf32> to vector<8x128xf32>
    %316 = arith.truncf %315 : vector<8x128xf32> to vector<8x128xbf16>
    %317 = vector.extract_strided_slice %314 {offsets = [0, 128], sizes = [8, 128], strides = [1, 1]} : vector<8x256xf32> to vector<8x128xf32>
    %318 = arith.truncf %317 : vector<8x128xf32> to vector<8x128xbf16>
    %319 = arith.negf %316 : vector<8x128xbf16>
    %320 = math.exp %319 : vector<8x128xbf16>
    %cst_64 = arith.constant 1.000000e+00 : bf16
    %321 = vector.broadcast %cst_64 : bf16 to vector<8x128xbf16>
    %322 = arith.addf %321, %320 : vector<8x128xbf16>
    %323 = arith.divf %321, %322 : vector<8x128xbf16>
    %324 = arith.negf %318 : vector<8x128xbf16>
    %325 = math.exp %324 : vector<8x128xbf16>
    %cst_65 = arith.constant 1.000000e+00 : bf16
    %326 = vector.broadcast %cst_65 : bf16 to vector<8x128xbf16>
    %327 = arith.addf %326, %325 : vector<8x128xbf16>
    %328 = arith.divf %326, %327 : vector<8x128xbf16>
    %329 = math.tanh %318 : vector<8x128xbf16>
    %330 = arith.select %17, %328, %329 : vector<8x128xi1>, vector<8x128xbf16>
    %331 = vector.extract_strided_slice %323 {offsets = [0, 0], sizes = [8, 64], strides = [1, 1]} : vector<8x128xbf16> to vector<8x64xbf16>
    %332 = arith.extf %331 : vector<8x64xbf16> to vector<8x64xf32>
    %333 = vector.extract_strided_slice %323 {offsets = [0, 64], sizes = [8, 64], strides = [1, 1]} : vector<8x128xbf16> to vector<8x64xbf16>
    %334 = arith.extf %333 : vector<8x64xbf16> to vector<8x64xf32>
    %335 = vector.extract_strided_slice %330 {offsets = [0, 0], sizes = [8, 64], strides = [1, 1]} : vector<8x128xbf16> to vector<8x64xbf16>
    %336 = arith.extf %335 : vector<8x64xbf16> to vector<8x64xf32>
    %337 = vector.extract_strided_slice %330 {offsets = [0, 64], sizes = [8, 64], strides = [1, 1]} : vector<8x128xbf16> to vector<8x64xbf16>
    %338 = arith.extf %337 : vector<8x64xbf16> to vector<8x64xf32>
    %339 = arith.mulf %334, %306 : vector<8x64xf32>
    %340 = arith.mulf %332, %338 : vector<8x64xf32>
    %341 = arith.addf %339, %340 : vector<8x64xf32>
    %342 = math.tanh %341 : vector<8x64xf32>
    %343 = arith.mulf %336, %342 : vector<8x64xf32>
    %344 = vector.broadcast %c7_i32 : i32 to vector<8x64xi32>
    %345 = arith.cmpi slt, %344, %14 : vector<8x64xi32>
    %346 = arith.select %345, %343, %305 : vector<8x64xi1>, vector<8x64xf32>
    %347 = arith.select %345, %341, %306 : vector<8x64xi1>, vector<8x64xf32>
    %c8_i32_66 = arith.constant 8 : i32
    %348 = arith.truncf %346 : vector<8x64xf32> to vector<8x64xbf16>
    %c0_67 = arith.constant 0 : index
    %c0_68 = arith.constant 0 : index
    %349 = vector.load %arg5[%c0_67, %c0_68] : memref<64x128xbf16, #tpu.memory_space<vmem>>, vector<64x128xbf16>
    %cst_69 = arith.constant dense<0.000000e+00> : vector<8x128xf32>
    %350 = tpu.matmul %348, %349, %cst_69 {dimension_numbers = #tpu.dot_dimension_numbers<[1], [0], [0], [1], [0, 0, 1, 1], [], []>} : vector<8x64xbf16>, vector<64x128xbf16>, vector<8x128xf32> -> vector<8x128xf32>
    %c0_70 = arith.constant 0 : index
    %c0_71 = arith.constant 0 : index
    %351 = vector.load %arg6[%c0_70, %c0_71] : memref<1x128xf32, #tpu.memory_space<vmem>>, vector<1x128xf32>
    %352 = vector.broadcast %351 : vector<1x128xf32> to vector<8x128xf32>
    %353 = arith.addf %350, %352 : vector<8x128xf32>
    %cst_72 = arith.constant 0.000000e+00 : f32
    %354 = vector.broadcast %cst_72 : f32 to vector<8x128xf32>
    %355 = arith.maximumf %353, %354 : vector<8x128xf32>
    %c0_73 = arith.constant 0 : index
    %c0_74 = arith.constant 0 : index
    %356 = vector.load %arg7[%c0_73, %c0_74] : memref<1x128xf32, #tpu.memory_space<vmem>>, vector<1x128xf32>
    %357 = vector.broadcast %356 : vector<1x128xf32> to vector<8x128xf32>
    %358 = arith.mulf %355, %357 : vector<8x128xf32>
    %cst_75 = arith.constant dense<0.000000e+00> : vector<8xf32>
    %359 = vector.multi_reduction <add>, %358, %cst_75 [1] : vector<8x128xf32> to vector<8xf32>
    %360 = vector.shape_cast %359 : vector<8xf32> to vector<8x1xf32>
    %c0_76 = arith.constant 0 : index
    %361 = memref.load %arg8[%c0_76] : memref<1xf32, #tpu.memory_space<smem>>
    %362 = vector.broadcast %361 : f32 to vector<8x1xf32>
    %363 = arith.addf %360, %362 : vector<8x1xf32>
    %364 = arith.negf %363 : vector<8x1xf32>
    %365 = math.exp %364 : vector<8x1xf32>
    %cst_77 = arith.constant 1.000000e+00 : f32
    %366 = vector.broadcast %cst_77 : f32 to vector<8x1xf32>
    %367 = arith.addf %366, %365 : vector<8x1xf32>
    %368 = arith.divf %366, %367 : vector<8x1xf32>
    %c0_78 = arith.constant 0 : index
    %c0_79 = arith.constant 0 : index
    %369 = vector.load %arg9[%c0_78, %c0_79] : memref<8x1xf32, #tpu.memory_space<vmem>>, vector<8x1xf32>
    tpu.vector_store %arg9[%c0_78, %c0_79], %368 {strides = array<i32>} : memref<8x1xf32, #tpu.memory_space<vmem>>, vector<8x1xf32>,
    return
  }
}

</mosaic_0001>

<llo_original>
// kernel: rnn_forward.1
$region0: #{rnn_forward.1}
  #allocation0 [shape = 'u32[]', space=smem, size = 0x4, offset = 0x4, fixed_abs, tag = 'smem constant byte address 0x4 - core index']
  #allocation1 [shape = 'u32[144,128]{1,0:T(1,128)}', space=vmem, size = 0x12000, scoped, tag = 'internal scratch']
  #allocation2 [shape = 'f32[64,256]{1,0:T(8,128)}', space=vmem, size = 0x10000, scoped, tag = 'scratch operand']
  #allocation3 [shape = 'f32[1]{0:T(128)S(6)}', space=smem, size = 0x200, scoped, tag = 'scoped memory for rnn_forward.1']
  %s0 = inlined_call_operand.vmem [shape: s32[64,1], index: 0, kind: input, shape index: {}]
  %s1 = inlined_call_operand.vmem [shape: s32[8,1], index: 1, kind: input, shape index: {}]
  %s2 = inlined_call_operand.hbm [shape: f32[128,256], index: 2, kind: input, shape index: {}]
  %s3 = inlined_call_operand.vmem [shape: f32[1,256], index: 3, kind: input, shape index: {}]
  %s4 = inlined_call_operand.vmem [shape: bf16[64,256], index: 4, kind: input, shape index: {}]
  %s5 = inlined_call_operand.vmem [shape: bf16[64,128], index: 5, kind: input, shape index: {}]
  %s6 = inlined_call_operand.vmem [shape: f32[1,128], index: 6, kind: input, shape index: {}]
  %s7 = inlined_call_operand.vmem [shape: f32[1,128], index: 7, kind: input, shape index: {}]
  %s8 = inlined_call_operand.<no memory space> [shape: f32[1], index: 8, kind: input, shape index: {}]
  %s9 = inlined_call_operand.vmem [shape: f32[8,1], index: 9, kind: output, shape index: {}]
  %s10 = sld [smem:[#allocation0]]
  $region50: #{rnn_forward.1} parent=0
    _
  %s12 = ssub.s32 1, %s10
  %s13 = scalar_select 0, %s12, %s10
  %14 = sst [smem:[#allocation3]] %s8
  $region1: #{rnn_forward.1} parent=0
    #allocation4 [shape = 'u8[131072]{0}', space=vmem, size = 0x20000, scoped, tag = 'input window, operand 2, single buffered']
    #allocation5 [shape = 's32[1]{0}', space=sflag, size = 0x4, scoped, tag = 'scoped memory for rnn_forward.1']
    %15 = vsyncpa [#allocation5], 0
    // Predicated region
    $region2: #{rnn_forward.1} parent=1 // pred_check
      _
    $region3: #{rnn_forward.1} parent=1 // pred_check_branch
      %17 = sbr.rel (0) target = $region5
    $region4: #{rnn_forward.1} parent=1 // pred_region
      _
    $region5: #{rnn_forward.1} parent=1 // pred_fallthru
      _
    // Predicated region
    $region6: #{rnn_forward.1} parent=1 // pred_check
      _
    $region7: #{rnn_forward.1} parent=1 // pred_check_branch
      %19 = sbr.rel (0) target = $region9
    $region8: #{rnn_forward.1} parent=1 // pred_region
      _
    $region9: #{rnn_forward.1} parent=1 // pred_fallthru
      _
    // Predicated region
    $region10: #{rnn_forward.1} parent=1 // pred_check
      _
    $region11: #{rnn_forward.1} parent=1 // pred_check_branch
      %21 = sbr.rel (0) target = $region13
    $region12: #{rnn_forward.1} parent=1 // pred_region
      %s23 = ssub.s32 4096, 4096
      %24 = vsyncadd [#allocation5], %s23
      %s25 = sshll.u32 [#allocation4], 4
      %s26 = int_to_ptr.vmem [resolvable:$true] %s25
      %31 = dma.hbm_to_vmem [thread:$0]  %s2, 4096, %s26, [#allocation5], 256, 256, 16
    $region13: #{rnn_forward.1} parent=1 // pred_fallthru
      _
    // Predicated region
    $region14: #{rnn_forward.1} parent=1 // pred_check
      _
    $region15: #{rnn_forward.1} parent=1 // pred_check_branch
      %33 = sbr.rel (0) target = $region17
    $region16: #{rnn_forward.1} parent=1 // pred_region
      _
    $region17: #{rnn_forward.1} parent=1 // pred_fallthru
      _
    // Predicated region
    $region18: #{rnn_forward.1} parent=1 // pred_check
      _
    $region19: #{rnn_forward.1} parent=1 // pred_check_branch
      %35 = sbr.rel (0) target = $region21
    $region20: #{rnn_forward.1} parent=1 // pred_region
      _
    $region21: #{rnn_forward.1} parent=1 // pred_fallthru
      _
    // Predicated region
    $region22: #{rnn_forward.1} parent=1 // pred_check
      _
    $region23: #{rnn_forward.1} parent=1 // pred_check_branch
      %37 = sbr.rel (0) target = $region25
    $region24: #{rnn_forward.1} parent=1 // pred_region
      _
    $region25: #{rnn_forward.1} parent=1 // pred_fallthru
      _
    // Predicated region
    $region26: #{rnn_forward.1} parent=1 // pred_check
      _
    $region27: #{rnn_forward.1} parent=1 // pred_check_branch
      %39 = sbr.rel (0) target = $region29
    $region28: #{rnn_forward.1} parent=1 // pred_region
      _
    $region29: #{rnn_forward.1} parent=1 // pred_fallthru
      _
    // Predicated region
    $region30: #{rnn_forward.1} parent=1 // pred_check
      _
    $region31: #{rnn_forward.1} parent=1 // pred_check_branch
      %41 = sbr.rel (0) target = $region33
    $region32: #{rnn_forward.1} parent=1 // pred_region
      _
    $region33: #{rnn_forward.1} parent=1 // pred_fallthru
      _
    // Predicated region
    $region34: #{rnn_forward.1} parent=1 // pred_check
      _
    $region35: #{rnn_forward.1} parent=1 // pred_check_branch
      %43 = sbr.rel (0) target = $region37
    $region36: #{rnn_forward.1} parent=1 // pred_region
      _
    $region37: #{rnn_forward.1} parent=1 // pred_fallthru
      _
    // Predicated region
    $region38: #{rnn_forward.1} parent=1 // pred_check
      _
    $region39: #{rnn_forward.1} parent=1 // pred_check_branch
      %45 = sbr.rel (0) target = $region41
    $region40: #{rnn_forward.1} parent=1 // pred_region
      %46 = dma.done [#allocation5], 4096
    $region41: #{rnn_forward.1} parent=1 // pred_fallthru
      _
    %v49 = vlaneseq
    %v50 = vand.u32 %v49, 127
    %v51 = vld [vmem:[%s0] sm:$0xff]
    %v52 = vld [vmem:[%s0 + $0x8] sm:$0xff]
    %v53 = vld [vmem:[%s0 + $0x10] sm:$0xff]
    %v54 = vld [vmem:[%s0 + $0x18] sm:$0xff]
    %v55 = vld [vmem:[%s0 + $0x20] sm:$0xff]
    %v56 = vld [vmem:[%s0 + $0x28] sm:$0xff]
    %v57 = vld [vmem:[%s0 + $0x30] sm:$0xff]
    %v58 = vld [vmem:[%s0 + $0x38] sm:$0xff]
    %59 = vset.pattern.permute.xlu0 0
    %60 = vperm.xlu0 %59, %v51
    %v61 = vpop.permute.xlu0 %60
    %62 = vset.pattern.permute.xlu0 0
    %63 = vperm.xlu0 %62, %v52
    %v64 = vpop.permute.xlu0 %63
    %65 = vset.pattern.permute.xlu0 0
    %66 = vperm.xlu0 %65, %v53
    %v67 = vpop.permute.xlu0 %66
    %68 = vset.pattern.permute.xlu0 0
    %69 = vperm.xlu0 %68, %v54
    %v70 = vpop.permute.xlu0 %69
    %71 = vset.pattern.permute.xlu0 0
    %72 = vperm.xlu0 %71, %v55
    %v73 = vpop.permute.xlu0 %72
    %74 = vset.pattern.permute.xlu0 0
    %75 = vperm.xlu0 %74, %v56
    %v76 = vpop.permute.xlu0 %75
    %77 = vset.pattern.permute.xlu0 0
    %78 = vperm.xlu0 %77, %v57
    %v79 = vpop.permute.xlu0 %78
    %80 = vset.pattern.permute.xlu0 0
    %81 = vperm.xlu0 %80, %v58
    %v82 = vpop.permute.xlu0 %81
    %vm83 = vcmp.eq.s32.totalorder %v50, %v61
    %vm84 = vcmp.eq.s32.totalorder %v50, %v64
    %vm85 = vcmp.eq.s32.totalorder %v50, %v67
    %vm86 = vcmp.eq.s32.totalorder %v50, %v70
    %vm87 = vcmp.eq.s32.totalorder %v50, %v73
    %vm88 = vcmp.eq.s32.totalorder %v50, %v76
    %vm89 = vcmp.eq.s32.totalorder %v50, %v79
    %vm90 = vcmp.eq.s32.totalorder %v50, %v82
    %v91 = vsel %vm83, 1, 0
    %v92 = vsel %vm84, 1, 0
    %v93 = vsel %vm85, 1, 0
    %v94 = vsel %vm86, 1, 0
    %v95 = vsel %vm87, 1, 0
    %v96 = vsel %vm88, 1, 0
    %v97 = vsel %vm89, 1, 0
    %v98 = vsel %vm90, 1, 0
    %v99 = vcvt.s32.f32 %v91
    %v100 = vcvt.s32.f32 %v92
    %v101 = vcvt.s32.f32 %v93
    %v102 = vcvt.s32.f32 %v94
    %v103 = vcvt.s32.f32 %v95
    %v104 = vcvt.s32.f32 %v96
    %v105 = vcvt.s32.f32 %v97
    %v106 = vcvt.s32.f32 %v98
    %v107 = vld [vmem:[#allocation4] sm:$0xff]
    %v108 = vld [vmem:[#allocation4 + $0x8] sm:$0xff]
    %v109 = vld [vmem:[#allocation4 + $0x10] sm:$0xff]
    %v110 = vld [vmem:[#allocation4 + $0x18] sm:$0xff]
    %v111 = vld [vmem:[#allocation4 + $0x20] sm:$0xff]
    %v112 = vld [vmem:[#allocation4 + $0x28] sm:$0xff]
    %v113 = vld [vmem:[#allocation4 + $0x30] sm:$0xff]
    %v114 = vld [vmem:[#allocation4 + $0x38] sm:$0xff]
    %v115 = vld [vmem:[#allocation4 + $0x40] sm:$0xff]
    %v116 = vld [vmem:[#allocation4 + $0x48] sm:$0xff]
    %v117 = vld [vmem:[#allocation4 + $0x50] sm:$0xff]
    %v118 = vld [vmem:[#allocation4 + $0x58] sm:$0xff]
    %v119 = vld [vmem:[#allocation4 + $0x60] sm:$0xff]
    %v120 = vld [vmem:[#allocation4 + $0x68] sm:$0xff]
    %v121 = vld [vmem:[#allocation4 + $0x70] sm:$0xff]
    %v122 = vld [vmem:[#allocation4 + $0x78] sm:$0xff]
    %v123 = vld [vmem:[#allocation4 + $0x80] sm:$0xff]
    %v124 = vld [vmem:[#allocation4 + $0x88] sm:$0xff]
    %v125 = vld [vmem:[#allocation4 + $0x90] sm:$0xff]
    %v126 = vld [vmem:[#allocation4 + $0x98] sm:$0xff]
    %v127 = vld [vmem:[#allocation4 + $0xa0] sm:$0xff]
    %v128 = vld [vmem:[#allocation4 + $0xa8] sm:$0xff]
    %v129 = vld [vmem:[#allocation4 + $0xb0] sm:$0xff]
    %v130 = vld [vmem:[#allocation4 + $0xb8] sm:$0xff]
    %v131 = vld [vmem:[#allocation4 + $0xc0] sm:$0xff]
    %v132 = vld [vmem:[#allocation4 + $0xc8] sm:$0xff]
    %v133 = vld [vmem:[#allocation4 + $0xd0] sm:$0xff]
    %v134 = vld [vmem:[#allocation4 + $0xd8] sm:$0xff]
    %v135 = vld [vmem:[#allocation4 + $0xe0] sm:$0xff]
    %v136 = vld [vmem:[#allocation4 + $0xe8] sm:$0xff]
    %v137 = vld [vmem:[#allocation4 + $0xf0] sm:$0xff]
    %v138 = vld [vmem:[#allocation4 + $0xf8] sm:$0xff]
    %v139 = vld [vmem:[%s3] sm:$0x3]
    %v141 = vlaneseq
    %v142 = vshrl.u32 %v141, 7
    %v143 = vsub.s32 0, %v142
    %v144 = vrot.slane %v139, %v143
    %v145 = vlaneseq
    %v146 = vshrl.u32 %v145, 7
    %v147 = vsub.s32 1, %v146
    %v148 = vrot.slane %v139, %v147
    %151 = vmatprep.subr.mxu0 %v108
    %152 = vmatpush1.msra.mxu0 %v107
    %153 = vmatprep.subr.mxu0 %v110
    %154 = vmatpush1.msra.mxu0 %v109
    %155 = vmatprep.subr.mxu0 %v112
    %156 = vmatpush1.msra.mxu0 %v111
    %157 = vmatprep.subr.mxu0 %v114
    %158 = vmatpush1.msra.mxu0 %v113
    %159 = vmatprep.subr.mxu0 %v116
    %160 = vmatpush1.msra.mxu0 %v115
    %161 = vmatprep.subr.mxu0 %v118
    %162 = vmatpush1.msra.mxu0 %v117
    %163 = vmatprep.subr.mxu0 %v120
    %164 = vmatpush1.msra.mxu0 %v119
    %165 = vmatprep.subr.mxu0 %v122
    %166 = vmatpush1.msra.mxu0 %v121
    %167 = vmatprep.subr.mxu0 %v124
    %168 = vmatpush1.msra.mxu0 %v123
    %169 = vmatprep.subr.mxu0 %v126
    %170 = vmatpush1.msra.mxu0 %v125
    %171 = vmatprep.subr.mxu0 %v128
    %172 = vmatpush1.msra.mxu0 %v127
    %173 = vmatprep.subr.mxu0 %v130
    %174 = vmatpush1.msra.mxu0 %v129
    %175 = vmatprep.subr.mxu0 %v132
    %176 = vmatpush1.msra.mxu0 %v131
    %177 = vmatprep.subr.mxu0 %v134
    %178 = vmatpush1.msra.mxu0 %v133
    %179 = vmatprep.subr.mxu0 %v136
    %180 = vmatpush1.msra.mxu0 %v135
    %181 = vmatprep.subr.mxu0 %v138
    %182 = vmatpush1.msra.mxu0 %v137
    %183 = vmatprep.subr.mxu0 0.0
    %184 = vmatpush1.msra.mxu0 0.0
    %185 = vmatprep.subr.mxu0 0.0
    %186 = vmatpush1.msra.mxu0 0.0
    %187 = vmatprep.subr.mxu0 0.0
    %188 = vmatpush1.msra.mxu0 0.0
    %189 = vmatprep.subr.mxu0 0.0
    %190 = vmatpush1.msra.mxu0 0.0
    %191 = vmatprep.subr.mxu0 0.0
    %192 = vmatpush1.msra.mxu0 0.0
    %193 = vmatprep.subr.mxu0 0.0
    %194 = vmatpush1.msra.mxu0 0.0
    %195 = vmatprep.subr.mxu0 0.0
    %196 = vmatpush1.msra.mxu0 0.0
    %197 = vmatprep.subr.mxu0 0.0
    %198 = vmatpush1.msra.mxu0 0.0
    %199 = vmatprep.subr.mxu0 0.0
    %200 = vmatpush1.msra.mxu0 0.0
    %201 = vmatprep.subr.mxu0 0.0
    %202 = vmatpush1.msra.mxu0 0.0
    %203 = vmatprep.subr.mxu0 0.0
    %204 = vmatpush1.msra.mxu0 0.0
    %205 = vmatprep.subr.mxu0 0.0
    %206 = vmatpush1.msra.mxu0 0.0
    %207 = vmatprep.subr.mxu0 0.0
    %208 = vmatpush1.msra.mxu0 0.0
    %209 = vmatprep.subr.mxu0 0.0
    %210 = vmatpush1.msra.mxu0 0.0
    %211 = vmatprep.subr.mxu0 0.0
    %212 = vmatpush1.msra.mxu0 0.0
    %213 = vmatprep.subr.mxu0 0.0
    %214 = vmatpush1.msra.mxu0 0.0
    %215 = vmatprep.mubr.f32.mxu0 0.0
    %216 = vmatmul.mubr.f32.gmra.mrb[0].mxu0 %v99
    %v217 = vpop.f32.mrb[0].mxu0
    %v218 = vadd.f32 %v144, %v217
    %v219 = vpop.f32.mrb[0].mxu0
    %v220 = vadd.f32 %v148, %v219
    %221 = vmatprep.mubr.f32.mxu0 0.0
    %222 = vmatmul.mubr.f32.gmra.mrb[0].mxu0 %v100
    %v223 = vpop.f32.mrb[0].mxu0
    %v224 = vadd.f32 %v144, %v223
    %v225 = vpop.f32.mrb[0].mxu0
    %v226 = vadd.f32 %v148, %v225
    %227 = vmatprep.mubr.f32.mxu0 0.0
    %228 = vmatmul.mubr.f32.gmra.mrb[0].mxu0 %v101
    %v229 = vpop.f32.mrb[0].mxu0
    %v230 = vadd.f32 %v144, %v229
    %v231 = vpop.f32.mrb[0].mxu0
    %v232 = vadd.f32 %v148, %v231
    %233 = vmatprep.mubr.f32.mxu0 0.0
    %234 = vmatmul.mubr.f32.gmra.mrb[0].mxu0 %v102
    %v235 = vpop.f32.mrb[0].mxu0
    %v236 = vadd.f32 %v144, %v235
    %v237 = vpop.f32.mrb[0].mxu0
    %v238 = vadd.f32 %v148, %v237
    %239 = vmatprep.mubr.f32.mxu0 0.0
    %240 = vmatmul.mubr.f32.gmra.mrb[0].mxu0 %v103
    %v241 = vpop.f32.mrb[0].mxu0
    %v242 = vadd.f32 %v144, %v241
    %v243 = vpop.f32.mrb[0].mxu0
    %v244 = vadd.f32 %v148, %v243
    %245 = vmatprep.mubr.f32.mxu0 0.0
    %246 = vmatmul.mubr.f32.gmra.mrb[0].mxu0 %v104
    %v247 = vpop.f32.mrb[0].mxu0
    %v248 = vadd.f32 %v144, %v247
    %v249 = vpop.f32.mrb[0].mxu0
    %v250 = vadd.f32 %v148, %v249
    %251 = vmatprep.mubr.f32.mxu0 0.0
    %252 = vmatmul.mubr.f32.gmra.mrb[0].mxu0 %v105
    %v253 = vpop.f32.mrb[0].mxu0
    %v254 = vadd.f32 %v144, %v253
    %v255 = vpop.f32.mrb[0].mxu0
    %v256 = vadd.f32 %v148, %v255
    %257 = vmatprep.mubr.f32.mxu0 0.0
    %258 = vmatmul.mubr.f32.gmra.mrb[0].mxu0 %v106
    %v259 = vpop.f32.mrb[0].mxu0
    %v260 = vadd.f32 %v144, %v259
    %v261 = vpop.f32.mrb[0].mxu0
    %v262 = vadd.f32 %v148, %v261
    %263 = vdwg.mxu0
    %264 = vst [vmem:[#allocation2] sm:$0xff] %v218
    %265 = vst [vmem:[#allocation2 + $0x8] sm:$0xff] %v220
    %266 = vst [vmem:[#allocation2 + $0x10] sm:$0xff] %v224
    %267 = vst [vmem:[#allocation2 + $0x18] sm:$0xff] %v226
    %268 = vst [vmem:[#allocation2 + $0x20] sm:$0xff] %v230
    %269 = vst [vmem:[#allocation2 + $0x28] sm:$0xff] %v232
    %270 = vst [vmem:[#allocation2 + $0x30] sm:$0xff] %v236
    %271 = vst [vmem:[#allocation2 + $0x38] sm:$0xff] %v238
    %272 = vst [vmem:[#allocation2 + $0x40] sm:$0xff] %v242
    %273 = vst [vmem:[#allocation2 + $0x48] sm:$0xff] %v244
    %274 = vst [vmem:[#allocation2 + $0x50] sm:$0xff] %v248
    %275 = vst [vmem:[#allocation2 + $0x58] sm:$0xff] %v250
    %276 = vst [vmem:[#allocation2 + $0x60] sm:$0xff] %v254
    %277 = vst [vmem:[#allocation2 + $0x68] sm:$0xff] %v256
    %278 = vst [vmem:[#allocation2 + $0x70] sm:$0xff] %v260
    %279 = vst [vmem:[#allocation2 + $0x78] sm:$0xff] %v262
    %v280 = vld [vmem:[%s1] sm:$0xff]
    %281 = vset.pattern.permute.xlu0 0
    %282 = vperm.xlu0 %281, %v280
    %v283 = vpop.permute.xlu0 %282
    %vm284 = vcmp.lt.s32.totalorder %v50, 64
    %s285 = smul.u32 0, 2
    %s286 = smul.addr %s285, 8
    %s287 = scalar_lea.vmem [#allocation2], %s286
    %v288 = vld [vmem:[%s287] sm:$0xff]
    %v289 = vld [vmem:[%s287 + $0x8] sm:$0xff]
    %v290 = vld [vmem:[%s4] sm:$0xff]
    %v291 = vld [vmem:[%s4 + $0x8] sm:$0xff]
    %v292 = vld [vmem:[%s4 + $0x10] sm:$0xff]
    %v293 = vld [vmem:[%s4 + $0x18] sm:$0xff]
    %v294 = vld [vmem:[%s4 + $0x20] sm:$0xff]
    %v295 = vld [vmem:[%s4 + $0x28] sm:$0xff]
    %v296 = vld [vmem:[%s4 + $0x30] sm:$0xff]
    %v297 = vld [vmem:[%s4 + $0x38] sm:$0xff]
    %v306 = vunpack.c.l.b16 %v290
    %v307 = vunpack.c.h.b16 %v290
    %v308 = vunpack.c.l.b16 %v291
    %v309 = vunpack.c.h.b16 %v291
    %v310 = vunpack.c.l.b16 %v292
    %v311 = vunpack.c.h.b16 %v292
    %v312 = vunpack.c.l.b16 %v293
    %v313 = vunpack.c.h.b16 %v293
    %v314 = vunpack.c.l.b16 %v294
    %v315 = vunpack.c.h.b16 %v294
    %v316 = vunpack.c.l.b16 %v295
    %v317 = vunpack.c.h.b16 %v295
    %v318 = vunpack.c.l.b16 %v296
    %v319 = vunpack.c.h.b16 %v296
    %v320 = vunpack.c.l.b16 %v297
    %v321 = vunpack.c.h.b16 %v297
    %v322 = vpack.c.b16 %v308, %v306
    %v323 = vpack.c.b16 %v309, %v307
    %v324 = vpack.c.b16 %v312, %v310
    %v325 = vpack.c.b16 %v313, %v311
    %v326 = vpack.c.b16 %v316, %v314
    %v327 = vpack.c.b16 %v317, %v315
    %v328 = vpack.c.b16 %v320, %v318
    %v329 = vpack.c.b16 %v321, %v319
    %vm338 = vcmask 523264
    %v340 = vsel %vm338, 0, 0
    %342 = vmatprep.subr.bf16.mxu0 %v323
    %343 = vmatpush1.bf16.msra.mxu0 %v322
    %344 = vmatprep.subr.bf16.mxu0 %v325
    %345 = vmatpush1.bf16.msra.mxu0 %v324
    %346 = vmatprep.subr.bf16.mxu0 %v327
    %347 = vmatpush1.bf16.msra.mxu0 %v326
    %348 = vmatprep.subr.bf16.mxu0 %v329
    %349 = vmatpush1.bf16.msra.mxu0 %v328
    %350 = vmatprep.subr.bf16.mxu0 0
    %351 = vmatpush1.bf16.msra.mxu0 0
    %352 = vmatprep.subr.bf16.mxu0 0
    %353 = vmatpush1.bf16.msra.mxu0 0
    %354 = vmatprep.subr.bf16.mxu0 0
    %355 = vmatpush1.bf16.msra.mxu0 0
    %356 = vmatprep.subr.bf16.mxu0 0
    %357 = vmatpush1.bf16.msra.mxu0 0
    %358 = vmatprep.subr.bf16.mxu0 0
    %359 = vmatpush1.bf16.msra.mxu0 0
    %360 = vmatprep.subr.bf16.mxu0 0
    %361 = vmatpush1.bf16.msra.mxu0 0
    %362 = vmatprep.subr.bf16.mxu0 0
    %363 = vmatpush1.bf16.msra.mxu0 0
    %364 = vmatprep.subr.bf16.mxu0 0
    %365 = vmatpush1.bf16.msra.mxu0 0
    %366 = vmatprep.subr.bf16.mxu0 0
    %367 = vmatpush1.bf16.msra.mxu0 0
    %368 = vmatprep.subr.bf16.mxu0 0
    %369 = vmatpush1.bf16.msra.mxu0 0
    %370 = vmatprep.subr.bf16.mxu0 0
    %371 = vmatpush1.bf16.msra.mxu0 0
    %372 = vmatprep.subr.bf16.mxu0 0
    %373 = vmatpush1.bf16.msra.mxu0 0
    %374 = vmatprep.mubr.bf16.mxu0 0
    %375 = vmatmul.mubr.bf16.gmra.mrb[0].mxu0 %v340
    %v376 = vpop.f32.mrb[0].mxu0
    %v377 = vadd.f32 0.0, %v376
    %v378 = vpop.f32.mrb[0].mxu0
    %v379 = vadd.f32 0.0, %v378
    %v380 = vpop.f32.mrb[0].mxu0
    %v381 = vpop.f32.mrb[0].mxu0
    %382 = vdwg.mxu0
    %v383 = vadd.f32 %v288, %v377
    %v384 = vadd.f32 %v289, %v379
    %v385 = vpack.c.bf16 %v383, %v383
    %v386 = vpack.c.bf16 %v384, %v384
    %v387 = vxor.u32 %v385, 2147516416
    %v389 = vmul.bf16 %v387, 1069105081
    %v390 = vpow.bf16.pop %v389
    %v391 = vadd.bf16 %v390, 1065369472
    %v392 = vrcp.bf16.pop %v391
    %v393 = vmul.bf16 1065369472, %v392
    %v394 = vxor.u32 %v386, 2147516416
    %v396 = vmul.bf16 %v394, 1069105081
    %v397 = vpow.bf16.pop %v396
    %v398 = vadd.bf16 %v397, 1065369472
    %v399 = vrcp.bf16.pop %v398
    %v400 = vmul.bf16 1065369472, %v399
    %v401 = vtanh.bf16.pop %v386
    %vm402 = vmpackc.low %vm284, %vm284
    %v403 = vsel %vm402, %v400, %v401
    %v404 = vunpack.c.l.bf16 %v393
    %v405 = vunpack.c.l.bf16 %v403
    %v406 = vmul.f32 %v404, 0.0
    %408 = vrot.lane.b32.xlu0 %v405, 64
    %v409 = vpop.permute.xlu0 %408
    %v411 = vmul.f32 %v404, %v409
    %413 = vrot.lane.b32.xlu0 %v411, 64
    %v414 = vpop.permute.xlu0 %413
    %v416 = vadd.f32 %v406, %v414
    %v417 = vtanh.pop %v416
    %419 = vrot.lane.b32.xlu0 %v417, 64
    %v420 = vpop.permute.xlu0 %419
    %v422 = vmul.f32 %v405, %v420
    %vm423 = vcmp.gt.s32.totalorder %v283, 0
    %v424 = vsel %vm423, %v422, 0.0
    %v425 = vsel %vm423, %v416, 0.0
    %s426 = smul.u32 1, 2
    %s427 = smul.addr %s426, 8
    %s428 = scalar_lea.vmem [#allocation2], %s427
    %v429 = vld [vmem:[%s428] sm:$0xff]
    %v430 = vld [vmem:[%s428 + $0x8] sm:$0xff]
    %v431 = vpack.c.bf16 %v424, %v424
    %v433 = vsel %vm338, %v431, 0
    %435 = vmatprep.subr.bf16.mxu0 %v323
    %436 = vmatpush1.bf16.msra.mxu0 %v322
    %437 = vmatprep.subr.bf16.mxu0 %v325
    %438 = vmatpush1.bf16.msra.mxu0 %v324
    %439 = vmatprep.subr.bf16.mxu0 %v327
    %440 = vmatpush1.bf16.msra.mxu0 %v326
    %441 = vmatprep.subr.bf16.mxu0 %v329
    %442 = vmatpush1.bf16.msra.mxu0 %v328
    %443 = vmatprep.subr.bf16.mxu0 0
    %444 = vmatpush1.bf16.msra.mxu0 0
    %445 = vmatprep.subr.bf16.mxu0 0
    %446 = vmatpush1.bf16.msra.mxu0 0
    %447 = vmatprep.subr.bf16.mxu0 0
    %448 = vmatpush1.bf16.msra.mxu0 0
    %449 = vmatprep.subr.bf16.mxu0 0
    %450 = vmatpush1.bf16.msra.mxu0 0
    %451 = vmatprep.subr.bf16.mxu0 0
    %452 = vmatpush1.bf16.msra.mxu0 0
    %453 = vmatprep.subr.bf16.mxu0 0
    %454 = vmatpush1.bf16.msra.mxu0 0
    %455 = vmatprep.subr.bf16.mxu0 0
    %456 = vmatpush1.bf16.msra.mxu0 0
    %457 = vmatprep.subr.bf16.mxu0 0
    %458 = vmatpush1.bf16.msra.mxu0 0
    %459 = vmatprep.subr.bf16.mxu0 0
    %460 = vmatpush1.bf16.msra.mxu0 0
    %461 = vmatprep.subr.bf16.mxu0 0
    %462 = vmatpush1.bf16.msra.mxu0 0
    %463 = vmatprep.subr.bf16.mxu0 0
    %464 = vmatpush1.bf16.msra.mxu0 0
    %465 = vmatprep.subr.bf16.mxu0 0
    %466 = vmatpush1.bf16.msra.mxu0 0
    %467 = vmatprep.mubr.bf16.mxu0 0
    %468 = vmatmul.mubr.bf16.gmra.mrb[0].mxu0 %v433
    %v469 = vpop.f32.mrb[0].mxu0
    %v470 = vadd.f32 0.0, %v469
    %v471 = vpop.f32.mrb[0].mxu0
    %v472 = vadd.f32 0.0, %v471
    %v473 = vpop.f32.mrb[0].mxu0
    %v474 = vpop.f32.mrb[0].mxu0
    %475 = vdwg.mxu0
    %v476 = vadd.f32 %v429, %v470
    %v477 = vadd.f32 %v430, %v472
    %v478 = vpack.c.bf16 %v476, %v476
    %v479 = vpack.c.bf16 %v477, %v477
    %v480 = vxor.u32 %v478, 2147516416
    %v482 = vmul.bf16 %v480, 1069105081
    %v483 = vpow.bf16.pop %v482
    %v484 = vadd.bf16 %v483, 1065369472
    %v485 = vrcp.bf16.pop %v484
    %v486 = vmul.bf16 1065369472, %v485
    %v487 = vxor.u32 %v479, 2147516416
    %v489 = vmul.bf16 %v487, 1069105081
    %v490 = vpow.bf16.pop %v489
    %v491 = vadd.bf16 %v490, 1065369472
    %v492 = vrcp.bf16.pop %v491
    %v493 = vmul.bf16 1065369472, %v492
    %v494 = vtanh.bf16.pop %v479
    %v495 = vsel %vm402, %v493, %v494
    %v496 = vunpack.c.l.bf16 %v486
    %v497 = vunpack.c.l.bf16 %v495
    %v498 = vmul.f32 %v496, %v425
    %500 = vrot.lane.b32.xlu0 %v497, 64
    %v501 = vpop.permute.xlu0 %500
    %v503 = vmul.f32 %v496, %v501
    %505 = vrot.lane.b32.xlu0 %v503, 64
    %v506 = vpop.permute.xlu0 %505
    %v508 = vadd.f32 %v498, %v506
    %v509 = vtanh.pop %v508
    %511 = vrot.lane.b32.xlu0 %v509, 64
    %v512 = vpop.permute.xlu0 %511
    %v514 = vmul.f32 %v497, %v512
    %vm515 = vcmp.gt.s32.totalorder %v283, 1
    %v516 = vsel %vm515, %v514, %v424
    %v517 = vsel %vm515, %v508, %v425
    %s518 = smul.u32 2, 2
    %s519 = smul.addr %s518, 8
    %s520 = scalar_lea.vmem [#allocation2], %s519
    %v521 = vld [vmem:[%s520] sm:$0xff]
    %v522 = vld [vmem:[%s520 + $0x8] sm:$0xff]
    %v523 = vpack.c.bf16 %v516, %v516
    %v525 = vsel %vm338, %v523, 0
    %527 = vmatprep.subr.bf16.mxu0 %v323
    %528 = vmatpush1.bf16.msra.mxu0 %v322
    %529 = vmatprep.subr.bf16.mxu0 %v325
    %530 = vmatpush1.bf16.msra.mxu0 %v324
    %531 = vmatprep.subr.bf16.mxu0 %v327
    %532 = vmatpush1.bf16.msra.mxu0 %v326
    %533 = vmatprep.subr.bf16.mxu0 %v329
    %534 = vmatpush1.bf16.msra.mxu0 %v328
    %535 = vmatprep.subr.bf16.mxu0 0
    %536 = vmatpush1.bf16.msra.mxu0 0
    %537 = vmatprep.subr.bf16.mxu0 0
    %538 = vmatpush1.bf16.msra.mxu0 0
    %539 = vmatprep.subr.bf16.mxu0 0
    %540 = vmatpush1.bf16.msra.mxu0 0
    %541 = vmatprep.subr.bf16.mxu0 0
    %542 = vmatpush1.bf16.msra.mxu0 0
    %543 = vmatprep.subr.bf16.mxu0 0
    %544 = vmatpush1.bf16.msra.mxu0 0
    %545 = vmatprep.subr.bf16.mxu0 0
    %546 = vmatpush1.bf16.msra.mxu0 0
    %547 = vmatprep.subr.bf16.mxu0 0
    %548 = vmatpush1.bf16.msra.mxu0 0
    %549 = vmatprep.subr.bf16.mxu0 0
    %550 = vmatpush1.bf16.msra.mxu0 0
    %551 = vmatprep.subr.bf16.mxu0 0
    %552 = vmatpush1.bf16.msra.mxu0 0
    %553 = vmatprep.subr.bf16.mxu0 0
    %554 = vmatpush1.bf16.msra.mxu0 0
    %555 = vmatprep.subr.bf16.mxu0 0
    %556 = vmatpush1.bf16.msra.mxu0 0
    %557 = vmatprep.subr.bf16.mxu0 0
    %558 = vmatpush1.bf16.msra.mxu0 0
    %559 = vmatprep.mubr.bf16.mxu0 0
    %560 = vmatmul.mubr.bf16.gmra.mrb[0].mxu0 %v525
    %v561 = vpop.f32.mrb[0].mxu0
    %v562 = vadd.f32 0.0, %v561
    %v563 = vpop.f32.mrb[0].mxu0
    %v564 = vadd.f32 0.0, %v563
    %v565 = vpop.f32.mrb[0].mxu0
    %v566 = vpop.f32.mrb[0].mxu0
    %567 = vdwg.mxu0
    %v568 = vadd.f32 %v521, %v562
    %v569 = vadd.f32 %v522, %v564
    %v570 = vpack.c.bf16 %v568, %v568
    %v571 = vpack.c.bf16 %v569, %v569
    %v572 = vxor.u32 %v570, 2147516416
    %v574 = vmul.bf16 %v572, 1069105081
    %v575 = vpow.bf16.pop %v574
    %v576 = vadd.bf16 %v575, 1065369472
    %v577 = vrcp.bf16.pop %v576
    %v578 = vmul.bf16 1065369472, %v577
    %v579 = vxor.u32 %v571, 2147516416
    %v581 = vmul.bf16 %v579, 1069105081
    %v582 = vpow.bf16.pop %v581
    %v583 = vadd.bf16 %v582, 1065369472
    %v584 = vrcp.bf16.pop %v583
    %v585 = vmul.bf16 1065369472, %v584
    %v586 = vtanh.bf16.pop %v571
    %v587 = vsel %vm402, %v585, %v586
    %v588 = vunpack.c.l.bf16 %v578
    %v589 = vunpack.c.l.bf16 %v587
    %v590 = vmul.f32 %v588, %v517
    %592 = vrot.lane.b32.xlu0 %v589, 64
    %v593 = vpop.permute.xlu0 %592
    %v595 = vmul.f32 %v588, %v593
    %597 = vrot.lane.b32.xlu0 %v595, 64
    %v598 = vpop.permute.xlu0 %597
    %v600 = vadd.f32 %v590, %v598
    %v601 = vtanh.pop %v600
    %603 = vrot.lane.b32.xlu0 %v601, 64
    %v604 = vpop.permute.xlu0 %603
    %v606 = vmul.f32 %v589, %v604
    %vm607 = vcmp.gt.s32.totalorder %v283, 2
    %v608 = vsel %vm607, %v606, %v516
    %v609 = vsel %vm607, %v600, %v517
    %s610 = smul.u32 3, 2
    %s611 = smul.addr %s610, 8
    %s612 = scalar_lea.vmem [#allocation2], %s611
    %v613 = vld [vmem:[%s612] sm:$0xff]
    %v614 = vld [vmem:[%s612 + $0x8] sm:$0xff]
    %v615 = vpack.c.bf16 %v608, %v608
    %v617 = vsel %vm338, %v615, 0
    %619 = vmatprep.subr.bf16.mxu0 %v323
    %620 = vmatpush1.bf16.msra.mxu0 %v322
    %621 = vmatprep.subr.bf16.mxu0 %v325
    %622 = vmatpush1.bf16.msra.mxu0 %v324
    %623 = vmatprep.subr.bf16.mxu0 %v327
    %624 = vmatpush1.bf16.msra.mxu0 %v326
    %625 = vmatprep.subr.bf16.mxu0 %v329
    %626 = vmatpush1.bf16.msra.mxu0 %v328
    %627 = vmatprep.subr.bf16.mxu0 0
    %628 = vmatpush1.bf16.msra.mxu0 0
    %629 = vmatprep.subr.bf16.mxu0 0
    %630 = vmatpush1.bf16.msra.mxu0 0
    %631 = vmatprep.subr.bf16.mxu0 0
    %632 = vmatpush1.bf16.msra.mxu0 0
    %633 = vmatprep.subr.bf16.mxu0 0
    %634 = vmatpush1.bf16.msra.mxu0 0
    %635 = vmatprep.subr.bf16.mxu0 0
    %636 = vmatpush1.bf16.msra.mxu0 0
    %637 = vmatprep.subr.bf16.mxu0 0
    %638 = vmatpush1.bf16.msra.mxu0 0
    %639 = vmatprep.subr.bf16.mxu0 0
    %640 = vmatpush1.bf16.msra.mxu0 0
    %641 = vmatprep.subr.bf16.mxu0 0
    %642 = vmatpush1.bf16.msra.mxu0 0
    %643 = vmatprep.subr.bf16.mxu0 0
    %644 = vmatpush1.bf16.msra.mxu0 0
    %645 = vmatprep.subr.bf16.mxu0 0
    %646 = vmatpush1.bf16.msra.mxu0 0
    %647 = vmatprep.subr.bf16.mxu0 0
    %648 = vmatpush1.bf16.msra.mxu0 0
    %649 = vmatprep.subr.bf16.mxu0 0
    %650 = vmatpush1.bf16.msra.mxu0 0
    %651 = vmatprep.mubr.bf16.mxu0 0
    %652 = vmatmul.mubr.bf16.gmra.mrb[0].mxu0 %v617
    %v653 = vpop.f32.mrb[0].mxu0
    %v654 = vadd.f32 0.0, %v653
    %v655 = vpop.f32.mrb[0].mxu0
    %v656 = vadd.f32 0.0, %v655
    %v657 = vpop.f32.mrb[0].mxu0
    %v658 = vpop.f32.mrb[0].mxu0
    %659 = vdwg.mxu0
    %v660 = vadd.f32 %v613, %v654
    %v661 = vadd.f32 %v614, %v656
    %v662 = vpack.c.bf16 %v660, %v660
    %v663 = vpack.c.bf16 %v661, %v661
    %v664 = vxor.u32 %v662, 2147516416
    %v666 = vmul.bf16 %v664, 1069105081
    %v667 = vpow.bf16.pop %v666
    %v668 = vadd.bf16 %v667, 1065369472
    %v669 = vrcp.bf16.pop %v668
    %v670 = vmul.bf16 1065369472, %v669
    %v671 = vxor.u32 %v663, 2147516416
    %v673 = vmul.bf16 %v671, 1069105081
    %v674 = vpow.bf16.pop %v673
    %v675 = vadd.bf16 %v674, 1065369472
    %v676 = vrcp.bf16.pop %v675
    %v677 = vmul.bf16 1065369472, %v676
    %v678 = vtanh.bf16.pop %v663
    %v679 = vsel %vm402, %v677, %v678
    %v680 = vunpack.c.l.bf16 %v670
    %v681 = vunpack.c.l.bf16 %v679
    %v682 = vmul.f32 %v680, %v609
    %684 = vrot.lane.b32.xlu0 %v681, 64
    %v685 = vpop.permute.xlu0 %684
    %v687 = vmul.f32 %v680, %v685
    %689 = vrot.lane.b32.xlu0 %v687, 64
    %v690 = vpop.permute.xlu0 %689
    %v692 = vadd.f32 %v682, %v690
    %v693 = vtanh.pop %v692
    %695 = vrot.lane.b32.xlu0 %v693, 64
    %v696 = vpop.permute.xlu0 %695
    %v698 = vmul.f32 %v681, %v696
    %vm699 = vcmp.gt.s32.totalorder %v283, 3
    %v700 = vsel %vm699, %v698, %v608
    %v701 = vsel %vm699, %v692, %v609
    %s702 = smul.u32 4, 2
    %s703 = smul.addr %s702, 8
    %s704 = scalar_lea.vmem [#allocation2], %s703
    %v705 = vld [vmem:[%s704] sm:$0xff]
    %v706 = vld [vmem:[%s704 + $0x8] sm:$0xff]
    %v707 = vpack.c.bf16 %v700, %v700
    %v709 = vsel %vm338, %v707, 0
    %711 = vmatprep.subr.bf16.mxu0 %v323
    %712 = vmatpush1.bf16.msra.mxu0 %v322
    %713 = vmatprep.subr.bf16.mxu0 %v325
    %714 = vmatpush1.bf16.msra.mxu0 %v324
    %715 = vmatprep.subr.bf16.mxu0 %v327
    %716 = vmatpush1.bf16.msra.mxu0 %v326
    %717 = vmatprep.subr.bf16.mxu0 %v329
    %718 = vmatpush1.bf16.msra.mxu0 %v328
    %719 = vmatprep.subr.bf16.mxu0 0
    %720 = vmatpush1.bf16.msra.mxu0 0
    %721 = vmatprep.subr.bf16.mxu0 0
    %722 = vmatpush1.bf16.msra.mxu0 0
    %723 = vmatprep.subr.bf16.mxu0 0
    %724 = vmatpush1.bf16.msra.mxu0 0
    %725 = vmatprep.subr.bf16.mxu0 0
    %726 = vmatpush1.bf16.msra.mxu0 0
    %727 = vmatprep.subr.bf16.mxu0 0
    %728 = vmatpush1.bf16.msra.mxu0 0
    %729 = vmatprep.subr.bf16.mxu0 0
    %730 = vmatpush1.bf16.msra.mxu0 0
    %731 = vmatprep.subr.bf16.mxu0 0
    %732 = vmatpush1.bf16.msra.mxu0 0
    %733 = vmatprep.subr.bf16.mxu0 0
    %734 = vmatpush1.bf16.msra.mxu0 0
    %735 = vmatprep.subr.bf16.mxu0 0
    %736 = vmatpush1.bf16.msra.mxu0 0
    %737 = vmatprep.subr.bf16.mxu0 0
    %738 = vmatpush1.bf16.msra.mxu0 0
    %739 = vmatprep.subr.bf16.mxu0 0
    %740 = vmatpush1.bf16.msra.mxu0 0
    %741 = vmatprep.subr.bf16.mxu0 0
    %742 = vmatpush1.bf16.msra.mxu0 0
    %743 = vmatprep.mubr.bf16.mxu0 0
    %744 = vmatmul.mubr.bf16.gmra.mrb[0].mxu0 %v709
    %v745 = vpop.f32.mrb[0].mxu0
    %v746 = vadd.f32 0.0, %v745
    %v747 = vpop.f32.mrb[0].mxu0
    %v748 = vadd.f32 0.0, %v747
    %v749 = vpop.f32.mrb[0].mxu0
    %v750 = vpop.f32.mrb[0].mxu0
    %751 = vdwg.mxu0
    %v752 = vadd.f32 %v705, %v746
    %v753 = vadd.f32 %v706, %v748
    %v754 = vpack.c.bf16 %v752, %v752
    %v755 = vpack.c.bf16 %v753, %v753
    %v756 = vxor.u32 %v754, 2147516416
    %v758 = vmul.bf16 %v756, 1069105081
    %v759 = vpow.bf16.pop %v758
    %v760 = vadd.bf16 %v759, 1065369472
    %v761 = vrcp.bf16.pop %v760
    %v762 = vmul.bf16 1065369472, %v761
    %v763 = vxor.u32 %v755, 2147516416
    %v765 = vmul.bf16 %v763, 1069105081
    %v766 = vpow.bf16.pop %v765
    %v767 = vadd.bf16 %v766, 1065369472
    %v768 = vrcp.bf16.pop %v767
    %v769 = vmul.bf16 1065369472, %v768
    %v770 = vtanh.bf16.pop %v755
    %v771 = vsel %vm402, %v769, %v770
    %v772 = vunpack.c.l.bf16 %v762
    %v773 = vunpack.c.l.bf16 %v771
    %v774 = vmul.f32 %v772, %v701
    %776 = vrot.lane.b32.xlu0 %v773, 64
    %v777 = vpop.permute.xlu0 %776
    %v779 = vmul.f32 %v772, %v777
    %781 = vrot.lane.b32.xlu0 %v779, 64
    %v782 = vpop.permute.xlu0 %781
    %v784 = vadd.f32 %v774, %v782
    %v785 = vtanh.pop %v784
    %787 = vrot.lane.b32.xlu0 %v785, 64
    %v788 = vpop.permute.xlu0 %787
    %v790 = vmul.f32 %v773, %v788
    %vm791 = vcmp.gt.s32.totalorder %v283, 4
    %v792 = vsel %vm791, %v790, %v700
    %v793 = vsel %vm791, %v784, %v701
    %s794 = smul.u32 5, 2
    %s795 = smul.addr %s794, 8
    %s796 = scalar_lea.vmem [#allocation2], %s795
    %v797 = vld [vmem:[%s796] sm:$0xff]
    %v798 = vld [vmem:[%s796 + $0x8] sm:$0xff]
    %v799 = vpack.c.bf16 %v792, %v792
    %v801 = vsel %vm338, %v799, 0
    %803 = vmatprep.subr.bf16.mxu0 %v323
    %804 = vmatpush1.bf16.msra.mxu0 %v322
    %805 = vmatprep.subr.bf16.mxu0 %v325
    %806 = vmatpush1.bf16.msra.mxu0 %v324
    %807 = vmatprep.subr.bf16.mxu0 %v327
    %808 = vmatpush1.bf16.msra.mxu0 %v326
    %809 = vmatprep.subr.bf16.mxu0 %v329
    %810 = vmatpush1.bf16.msra.mxu0 %v328
    %811 = vmatprep.subr.bf16.mxu0 0
    %812 = vmatpush1.bf16.msra.mxu0 0
    %813 = vmatprep.subr.bf16.mxu0 0
    %814 = vmatpush1.bf16.msra.mxu0 0
    %815 = vmatprep.subr.bf16.mxu0 0
    %816 = vmatpush1.bf16.msra.mxu0 0
    %817 = vmatprep.subr.bf16.mxu0 0
    %818 = vmatpush1.bf16.msra.mxu0 0
    %819 = vmatprep.subr.bf16.mxu0 0
    %820 = vmatpush1.bf16.msra.mxu0 0
    %821 = vmatprep.subr.bf16.mxu0 0
    %822 = vmatpush1.bf16.msra.mxu0 0
    %823 = vmatprep.subr.bf16.mxu0 0
    %824 = vmatpush1.bf16.msra.mxu0 0
    %825 = vmatprep.subr.bf16.mxu0 0
    %826 = vmatpush1.bf16.msra.mxu0 0
    %827 = vmatprep.subr.bf16.mxu0 0
    %828 = vmatpush1.bf16.msra.mxu0 0
    %829 = vmatprep.subr.bf16.mxu0 0
    %830 = vmatpush1.bf16.msra.mxu0 0
    %831 = vmatprep.subr.bf16.mxu0 0
    %832 = vmatpush1.bf16.msra.mxu0 0
    %833 = vmatprep.subr.bf16.mxu0 0
    %834 = vmatpush1.bf16.msra.mxu0 0
    %835 = vmatprep.mubr.bf16.mxu0 0
    %836 = vmatmul.mubr.bf16.gmra.mrb[0].mxu0 %v801
    %v837 = vpop.f32.mrb[0].mxu0
    %v838 = vadd.f32 0.0, %v837
    %v839 = vpop.f32.mrb[0].mxu0
    %v840 = vadd.f32 0.0, %v839
    %v841 = vpop.f32.mrb[0].mxu0
    %v842 = vpop.f32.mrb[0].mxu0
    %843 = vdwg.mxu0
    %v844 = vadd.f32 %v797, %v838
    %v845 = vadd.f32 %v798, %v840
    %v846 = vpack.c.bf16 %v844, %v844
    %v847 = vpack.c.bf16 %v845, %v845
    %v848 = vxor.u32 %v846, 2147516416
    %v850 = vmul.bf16 %v848, 1069105081
    %v851 = vpow.bf16.pop %v850
    %v852 = vadd.bf16 %v851, 1065369472
    %v853 = vrcp.bf16.pop %v852
    %v854 = vmul.bf16 1065369472, %v853
    %v855 = vxor.u32 %v847, 2147516416
    %v857 = vmul.bf16 %v855, 1069105081
    %v858 = vpow.bf16.pop %v857
    %v859 = vadd.bf16 %v858, 1065369472
    %v860 = vrcp.bf16.pop %v859
    %v861 = vmul.bf16 1065369472, %v860
    %v862 = vtanh.bf16.pop %v847
    %v863 = vsel %vm402, %v861, %v862
    %v864 = vunpack.c.l.bf16 %v854
    %v865 = vunpack.c.l.bf16 %v863
    %v866 = vmul.f32 %v864, %v793
    %868 = vrot.lane.b32.xlu0 %v865, 64
    %v869 = vpop.permute.xlu0 %868
    %v871 = vmul.f32 %v864, %v869
    %873 = vrot.lane.b32.xlu0 %v871, 64
    %v874 = vpop.permute.xlu0 %873
    %v876 = vadd.f32 %v866, %v874
    %v877 = vtanh.pop %v876
    %879 = vrot.lane.b32.xlu0 %v877, 64
    %v880 = vpop.permute.xlu0 %879
    %v882 = vmul.f32 %v865, %v880
    %vm883 = vcmp.gt.s32.totalorder %v283, 5
    %v884 = vsel %vm883, %v882, %v792
    %v885 = vsel %vm883, %v876, %v793
    %s886 = smul.u32 6, 2
    %s887 = smul.addr %s886, 8
    %s888 = scalar_lea.vmem [#allocation2], %s887
    %v889 = vld [vmem:[%s888] sm:$0xff]
    %v890 = vld [vmem:[%s888 + $0x8] sm:$0xff]
    %v891 = vpack.c.bf16 %v884, %v884
    %v893 = vsel %vm338, %v891, 0
    %895 = vmatprep.subr.bf16.mxu0 %v323
    %896 = vmatpush1.bf16.msra.mxu0 %v322
    %897 = vmatprep.subr.bf16.mxu0 %v325
    %898 = vmatpush1.bf16.msra.mxu0 %v324
    %899 = vmatprep.subr.bf16.mxu0 %v327
    %900 = vmatpush1.bf16.msra.mxu0 %v326
    %901 = vmatprep.subr.bf16.mxu0 %v329
    %902 = vmatpush1.bf16.msra.mxu0 %v328
    %903 = vmatprep.subr.bf16.mxu0 0
    %904 = vmatpush1.bf16.msra.mxu0 0
    %905 = vmatprep.subr.bf16.mxu0 0
    %906 = vmatpush1.bf16.msra.mxu0 0
    %907 = vmatprep.subr.bf16.mxu0 0
    %908 = vmatpush1.bf16.msra.mxu0 0
    %909 = vmatprep.subr.bf16.mxu0 0
    %910 = vmatpush1.bf16.msra.mxu0 0
    %911 = vmatprep.subr.bf16.mxu0 0
    %912 = vmatpush1.bf16.msra.mxu0 0
    %913 = vmatprep.subr.bf16.mxu0 0
    %914 = vmatpush1.bf16.msra.mxu0 0
    %915 = vmatprep.subr.bf16.mxu0 0
    %916 = vmatpush1.bf16.msra.mxu0 0
    %917 = vmatprep.subr.bf16.mxu0 0
    %918 = vmatpush1.bf16.msra.mxu0 0
    %919 = vmatprep.subr.bf16.mxu0 0
    %920 = vmatpush1.bf16.msra.mxu0 0
    %921 = vmatprep.subr.bf16.mxu0 0
    %922 = vmatpush1.bf16.msra.mxu0 0
    %923 = vmatprep.subr.bf16.mxu0 0
    %924 = vmatpush1.bf16.msra.mxu0 0
    %925 = vmatprep.subr.bf16.mxu0 0
    %926 = vmatpush1.bf16.msra.mxu0 0
    %927 = vmatprep.mubr.bf16.mxu0 0
    %928 = vmatmul.mubr.bf16.gmra.mrb[0].mxu0 %v893
    %v929 = vpop.f32.mrb[0].mxu0
    %v930 = vadd.f32 0.0, %v929
    %v931 = vpop.f32.mrb[0].mxu0
    %v932 = vadd.f32 0.0, %v931
    %v933 = vpop.f32.mrb[0].mxu0
    %v934 = vpop.f32.mrb[0].mxu0
    %935 = vdwg.mxu0
    %v936 = vadd.f32 %v889, %v930
    %v937 = vadd.f32 %v890, %v932
    %v938 = vpack.c.bf16 %v936, %v936
    %v939 = vpack.c.bf16 %v937, %v937
    %v940 = vxor.u32 %v938, 2147516416
    %v942 = vmul.bf16 %v940, 1069105081
    %v943 = vpow.bf16.pop %v942
    %v944 = vadd.bf16 %v943, 1065369472
    %v945 = vrcp.bf16.pop %v944
    %v946 = vmul.bf16 1065369472, %v945
    %v947 = vxor.u32 %v939, 2147516416
    %v949 = vmul.bf16 %v947, 1069105081
    %v950 = vpow.bf16.pop %v949
    %v951 = vadd.bf16 %v950, 1065369472
    %v952 = vrcp.bf16.pop %v951
    %v953 = vmul.bf16 1065369472, %v952
    %v954 = vtanh.bf16.pop %v939
    %v955 = vsel %vm402, %v953, %v954
    %v956 = vunpack.c.l.bf16 %v946
    %v957 = vunpack.c.l.bf16 %v955
    %v958 = vmul.f32 %v956, %v885
    %960 = vrot.lane.b32.xlu0 %v957, 64
    %v961 = vpop.permute.xlu0 %960
    %v963 = vmul.f32 %v956, %v961
    %965 = vrot.lane.b32.xlu0 %v963, 64
    %v966 = vpop.permute.xlu0 %965
    %v968 = vadd.f32 %v958, %v966
    %v969 = vtanh.pop %v968
    %971 = vrot.lane.b32.xlu0 %v969, 64
    %v972 = vpop.permute.xlu0 %971
    %v974 = vmul.f32 %v957, %v972
    %vm975 = vcmp.gt.s32.totalorder %v283, 6
    %v976 = vsel %vm975, %v974, %v884
    %v977 = vsel %vm975, %v968, %v885
    %s978 = smul.u32 7, 2
    %s979 = smul.addr %s978, 8
    %s980 = scalar_lea.vmem [#allocation2], %s979
    %v981 = vld [vmem:[%s980] sm:$0xff]
    %v982 = vld [vmem:[%s980 + $0x8] sm:$0xff]
    %v983 = vpack.c.bf16 %v976, %v976
    %v985 = vsel %vm338, %v983, 0
    %987 = vmatprep.subr.bf16.mxu0 %v323
    %988 = vmatpush1.bf16.msra.mxu0 %v322
    %989 = vmatprep.subr.bf16.mxu0 %v325
    %990 = vmatpush1.bf16.msra.mxu0 %v324
    %991 = vmatprep.subr.bf16.mxu0 %v327
    %992 = vmatpush1.bf16.msra.mxu0 %v326
    %993 = vmatprep.subr.bf16.mxu0 %v329
    %994 = vmatpush1.bf16.msra.mxu0 %v328
    %995 = vmatprep.subr.bf16.mxu0 0
    %996 = vmatpush1.bf16.msra.mxu0 0
    %997 = vmatprep.subr.bf16.mxu0 0
    %998 = vmatpush1.bf16.msra.mxu0 0
    %999 = vmatprep.subr.bf16.mxu0 0
    %1000 = vmatpush1.bf16.msra.mxu0 0
    %1001 = vmatprep.subr.bf16.mxu0 0
    %1002 = vmatpush1.bf16.msra.mxu0 0
    %1003 = vmatprep.subr.bf16.mxu0 0
    %1004 = vmatpush1.bf16.msra.mxu0 0
    %1005 = vmatprep.subr.bf16.mxu0 0
    %1006 = vmatpush1.bf16.msra.mxu0 0
    %1007 = vmatprep.subr.bf16.mxu0 0
    %1008 = vmatpush1.bf16.msra.mxu0 0
    %1009 = vmatprep.subr.bf16.mxu0 0
    %1010 = vmatpush1.bf16.msra.mxu0 0
    %1011 = vmatprep.subr.bf16.mxu0 0
    %1012 = vmatpush1.bf16.msra.mxu0 0
    %1013 = vmatprep.subr.bf16.mxu0 0
    %1014 = vmatpush1.bf16.msra.mxu0 0
    %1015 = vmatprep.subr.bf16.mxu0 0
    %1016 = vmatpush1.bf16.msra.mxu0 0
    %1017 = vmatprep.subr.bf16.mxu0 0
    %1018 = vmatpush1.bf16.msra.mxu0 0
    %1019 = vmatprep.mubr.bf16.mxu0 0
    %1020 = vmatmul.mubr.bf16.gmra.mrb[0].mxu0 %v985
    %v1021 = vpop.f32.mrb[0].mxu0
    %v1022 = vadd.f32 0.0, %v1021
    %v1023 = vpop.f32.mrb[0].mxu0
    %v1024 = vadd.f32 0.0, %v1023
    %v1025 = vpop.f32.mrb[0].mxu0
    %v1026 = vpop.f32.mrb[0].mxu0
    %1027 = vdwg.mxu0
    %v1028 = vadd.f32 %v981, %v1022
    %v1029 = vadd.f32 %v982, %v1024
    %v1030 = vpack.c.bf16 %v1028, %v1028
    %v1031 = vpack.c.bf16 %v1029, %v1029
    %v1032 = vxor.u32 %v1030, 2147516416
    %v1034 = vmul.bf16 %v1032, 1069105081
    %v1035 = vpow.bf16.pop %v1034
    %v1036 = vadd.bf16 %v1035, 1065369472
    %v1037 = vrcp.bf16.pop %v1036
    %v1038 = vmul.bf16 1065369472, %v1037
    %v1039 = vxor.u32 %v1031, 2147516416
    %v1041 = vmul.bf16 %v1039, 1069105081
    %v1042 = vpow.bf16.pop %v1041
    %v1043 = vadd.bf16 %v1042, 1065369472
    %v1044 = vrcp.bf16.pop %v1043
    %v1045 = vmul.bf16 1065369472, %v1044
    %v1046 = vtanh.bf16.pop %v1031
    %v1047 = vsel %vm402, %v1045, %v1046
    %v1048 = vunpack.c.l.bf16 %v1038
    %v1049 = vunpack.c.l.bf16 %v1047
    %v1050 = vmul.f32 %v1048, %v977
    %1052 = vrot.lane.b32.xlu0 %v1049, 64
    %v1053 = vpop.permute.xlu0 %1052
    %v1055 = vmul.f32 %v1048, %v1053
    %1057 = vrot.lane.b32.xlu0 %v1055, 64
    %v1058 = vpop.permute.xlu0 %1057
    %v1060 = vadd.f32 %v1050, %v1058
    %v1061 = vtanh.pop %v1060
    %1063 = vrot.lane.b32.xlu0 %v1061, 64
    %v1064 = vpop.permute.xlu0 %1063
    %v1066 = vmul.f32 %v1049, %v1064
    %vm1067 = vcmp.gt.s32.totalorder %v283, 7
    %v1068 = vsel %vm1067, %v1066, %v976
    %v1069 = vpack.c.bf16 %v1068, %v1068
    %v1070 = vld [vmem:[%s5] sm:$0xf]
    %v1071 = vld [vmem:[%s5 + $0x4] sm:$0xf]
    %v1072 = vld [vmem:[%s5 + $0x8] sm:$0xf]
    %v1073 = vld [vmem:[%s5 + $0xc] sm:$0xf]
    %v1074 = vld [vmem:[%s5 + $0x10] sm:$0xf]
    %v1075 = vld [vmem:[%s5 + $0x14] sm:$0xf]
    %v1076 = vld [vmem:[%s5 + $0x18] sm:$0xf]
    %v1077 = vld [vmem:[%s5 + $0x1c] sm:$0xf]
    %v1078 = vld [vmem:[%s6] sm:$0x1]
    %v1080 = vlaneseq
    %v1081 = vshrl.u32 %v1080, 7
    %v1082 = vsub.s32 0, %v1081
    %v1083 = vrot.slane %v1078, %v1082
    %v1093 = vunpack.c.l.b16 %v1070
    %v1094 = vunpack.c.l.b16 %v1071
    %v1095 = vunpack.c.l.b16 %v1072
    %v1096 = vunpack.c.l.b16 %v1073
    %v1097 = vunpack.c.l.b16 %v1074
    %v1098 = vunpack.c.l.b16 %v1075
    %v1099 = vunpack.c.l.b16 %v1076
    %v1100 = vunpack.c.l.b16 %v1077
    %v1101 = vpack.c.b16 %v1094, %v1093
    %v1102 = vpack.c.b16 %v1096, %v1095
    %v1103 = vpack.c.b16 %v1098, %v1097
    %v1104 = vpack.c.b16 %v1100, %v1099
    %v1110 = vsel %vm338, %v1069, 0
    %1112 = vmatprep.subr.bf16.mxu0 0
    %1113 = vmatpush1.bf16.msra.mxu0 %v1101
    %1114 = vmatprep.subr.bf16.mxu0 0
    %1115 = vmatpush1.bf16.msra.mxu0 %v1102
    %1116 = vmatprep.subr.bf16.mxu0 0
    %1117 = vmatpush1.bf16.msra.mxu0 %v1103
    %1118 = vmatprep.subr.bf16.mxu0 0
    %1119 = vmatpush1.bf16.msra.mxu0 %v1104
    %1120 = vmatprep.subr.bf16.mxu0 0
    %1121 = vmatpush1.bf16.msra.mxu0 0
    %1122 = vmatprep.subr.bf16.mxu0 0
    %1123 = vmatpush1.bf16.msra.mxu0 0
    %1124 = vmatprep.subr.bf16.mxu0 0
    %1125 = vmatpush1.bf16.msra.mxu0 0
    %1126 = vmatprep.subr.bf16.mxu0 0
    %1127 = vmatpush1.bf16.msra.mxu0 0
    %1128 = vmatprep.subr.bf16.mxu0 0
    %1129 = vmatpush1.bf16.msra.mxu0 0
    %1130 = vmatprep.subr.bf16.mxu0 0
    %1131 = vmatpush1.bf16.msra.mxu0 0
    %1132 = vmatprep.subr.bf16.mxu0 0
    %1133 = vmatpush1.bf16.msra.mxu0 0
    %1134 = vmatprep.subr.bf16.mxu0 0
    %1135 = vmatpush1.bf16.msra.mxu0 0
    %1136 = vmatprep.subr.bf16.mxu0 0
    %1137 = vmatpush1.bf16.msra.mxu0 0
    %1138 = vmatprep.subr.bf16.mxu0 0
    %1139 = vmatpush1.bf16.msra.mxu0 0
    %1140 = vmatprep.subr.bf16.mxu0 0
    %1141 = vmatpush1.bf16.msra.mxu0 0
    %1142 = vmatprep.subr.bf16.mxu0 0
    %1143 = vmatpush1.bf16.msra.mxu0 0
    %1144 = vmatprep.mubr.bf16.mxu0 0
    %1145 = vmatmul.mubr.bf16.gmra.mrb[0].mxu0 %v1110
    %v1146 = vpop.f32.mrb[0].mxu0
    %v1147 = vadd.f32 %v1083, %v1146
    %v1148 = vpop.f32.mrb[0].mxu0
    %v1149 = vpop.f32.mrb[0].mxu0
    %v1150 = vpop.f32.mrb[0].mxu0
    %1151 = vdwg.mxu0
    %v1152 = vmax.f32 %v1147, 0.0
    %v1153 = vld [vmem:[%s7] sm:$0x1]
    %v1155 = vlaneseq
    %v1156 = vshrl.u32 %v1155, 7
    %v1157 = vsub.s32 0, %v1156
    %v1158 = vrot.slane %v1153, %v1157
    %v1160 = vmul.f32 %v1152, %v1158
    %1161 = vadd.xlane.f32.xlu0 %v1160
    %v1162 = vpop.xlane.xlu0 %1161
    %s1163 = sld [smem:[#allocation3]]
    %v1164 = vstv %s1163
    %v1165 = vadd.f32 %v1162, %v1164
    %v1166 = vxor.u32 %v1165, 2147483648
    %v1167 = vmul.f32 %v1166, 1.442695
    %v1168 = vpow.pop %v1167
    %v1169 = vadd.f32 %v1168, 1.0
    %v1170 = vrcp.pop %v1169
    %v1171 = vmul.f32 1.0, %v1170
    %vm1172 = vcmask 7168
    %1173 = vst.msk [vmem:[%s9] sm:$0xff] %vm1172, %v1171
    // Predicated region
    $region42: #{rnn_forward.1} parent=1 // pred_check
      _
    $region43: #{rnn_forward.1} parent=1 // pred_check_branch
      %1175 = sbr.rel (0) target = $region45
    $region44: #{rnn_forward.1} parent=1 // pred_region
      _
    $region45: #{rnn_forward.1} parent=1 // pred_fallthru
      _
    // Predicated region
    $region46: #{rnn_forward.1} parent=1 // pred_check
      _
    $region47: #{rnn_forward.1} parent=1 // pred_check_branch
      %1177 = sbr.rel (0) target = $region49
    $region48: #{rnn_forward.1} parent=1 // pred_region
      _
    $region49: #{rnn_forward.1} parent=1 // pred_fallthru
      _
    %1178 = vsyncpa [#allocation5], 1

</llo_original>
